<compile_context>
chip_gen: v6e
topology: v6e:2x2x1
jax: 0.10.0
libtpu: 0.0.40
codegen_flags: <defaults>
</compile_context>

<pallas_src>
import jax
import jax.numpy as jnp
from jax.experimental import pallas as pl
from jax.experimental.pallas import tpu as pltpu

_SQRT_2_OVER_PI = 0.7978845608028654


def _gelu_tanh(x):
    # TODO(synk): PyTorch nn.GELU() defaults to the exact erf formulation; the
    # tanh approximation (max |err| ~3e-3) is used for portable Mosaic lowering.
    return 0.5 * x * (1.0 + jnp.tanh(_SQRT_2_OVER_PI * (x + 0.044715 * (x * x * x))))


def _mlp_kernel(x_ref, w1_ref, b1_ref, w2_ref, b2_ref, o_ref, acc_ref):
    # x: (tm, C) bf16 ; w1: (C, tk) bf16 ; b1: (1, tk) f32
    # w2: (tk, O_pad) bf16 ; b2: (1, O_pad) f32 ; o: (tm, O_pad)
    # acc: (tm, O_pad) f32 scratch, resident across the hidden-dim grid axis.
    k = pl.program_id(1)

    @pl.when(k == 0)
    def _init():
        acc_ref[...] = jnp.zeros_like(acc_ref)

    h = jnp.dot(x_ref[...], w1_ref[...], preferred_element_type=jnp.float32)
    h = _gelu_tanh(h + b1_ref[...])                      # f32 bias-add + GELU
    acc_ref[...] += jnp.dot(h.astype(jnp.bfloat16), w2_ref[...],
                            preferred_element_type=jnp.float32)

    @pl.when(k == pl.num_programs(1) - 1)
    def _finalize():
        # Dropout(p=0.0) is identity -> nothing else to do.
        o_ref[...] = (acc_ref[...] + b2_ref[...]).astype(o_ref.dtype)


def _round_up(v, m):
    return ((v + m - 1) // m) * m


def _pick_hidden_tile(hd, max_tile):
    """Largest multiple-of-128 tile <= max_tile that divides hd exactly."""
    if hd <= max_tile:
        return hd
    start = max_tile - (max_tile % 128)
    for cand in range(start, 127, -128):
        if hd % cand == 0:
            return cand
    return hd  # no clean divisor: keep the hidden dim resident


def _weight_spec(shape, index_map, single_buffer):
    if single_buffer:
        # Grid-invariant block: one buffer is enough (no re-fetch, half the VMEM).
        return pl.BlockSpec(shape, index_map, pipeline_mode=pl.Buffered(1))
    return pl.BlockSpec(shape, index_map)


def mlp_forward(x, params, *, tm=512, hd_tile_max=1024):
    """x: (..., in_features) -> (..., out_features). Fused fc1 + GELU + fc2."""
    w1, b1, w2, b2 = params["w1"], params["b1"], params["w2"], params["b2"]
    C, Hd = w1.shape
    O = w2.shape[1]
    lead = x.shape[:-1]
    out_dtype = x.dtype

    x2 = x.reshape(-1, C)                      # metadata-only (channels-last)
    M = x2.shape[0]

    # Row tile: multiple of 8, clamped to ceil(M/2) so the grid has >= 2 steps
    # on the "parallel" axis (v7x megacore), still big enough to amortize the
    # ~0.35us per-grid-step overhead.
    half_m = _round_up(max(1, -(-M // 2)), 8)
    tm = max(8, min(_round_up(tm, 8), half_m))
    n_m = -(-M // tm)

    # Hidden-dim tile: exact divisor so no padded contraction chunks.
    tk = _pick_hidden_tile(Hd, hd_tile_max)
    n_hd = Hd // tk
    weights_resident = (n_hd == 1)

    # Pad out_features to a lane-dense multiple of 128 (unmasked vst stores);
    # padded columns are zero weights / zero bias, stripped after the call.
    O_pad = _round_up(O, 128)
    if O_pad != O:
        w2 = jnp.pad(w2, ((0, 0), (0, O_pad - O)))
        b2 = jnp.pad(b2, (0, O_pad - O))

    # bf16 matmul operands (f32 accumulation inside the kernel).
    x2 = x2.astype(jnp.bfloat16)
    w1 = w1.astype(jnp.bfloat16)
    w2 = w2.astype(jnp.bfloat16)
    b1 = b1.reshape(1, Hd).astype(jnp.float32)
    b2 = b2.reshape(1, O_pad).astype(jnp.float32)

    # Explicit scoped-VMEM budget (+25% headroom), capped at v7x physical.
    out_isz = jnp.dtype(out_dtype).itemsize
    wbuf = 1 if weights_resident else 2
    vmem_need = (
        tm * C * 2 * 2                    # x tile, double buffered, bf16
        + C * tk * 2 * wbuf               # W1 tile(s), bf16
        + tk * 4 * wbuf                   # b1, f32
        + tk * O_pad * 2 * wbuf           # W2 tile(s), bf16
        + O_pad * 4 * wbuf                # b2, f32
        + tm * O_pad * out_isz * 2        # out tile, double buffered
        + tm * O_pad * 4                  # f32 accumulator scratch
        + tm * tk * 4 * 2                 # h intermediate (+ bf16 copy)
    )
    vmem_limit = min(max(int(vmem_need * 1.25), 32 * 1024 * 1024),
                     64 * 1024 * 1024)

    def _build(single_buffer):
        grid_spec = pltpu.PrefetchScalarGridSpec(
            num_scalar_prefetch=0,
            grid=(n_m, n_hd),
            in_specs=[
                pl.BlockSpec((tm, C), lambda i, k: (i, 0)),              # tokens
                _weight_spec((C, tk), lambda i, k: (0, k), single_buffer),    # W1
                _weight_spec((1, tk), lambda i, k: (0, k), single_buffer),    # b1
                _weight_spec((tk, O_pad), lambda i, k: (k, 0), single_buffer),  # W2
                _weight_spec((1, O_pad), lambda i, k: (0, 0), single_buffer),   # b2
            ],
            out_specs=pl.BlockSpec((tm, O_pad), lambda i, k: (i, 0)),
            scratch_shapes=[pltpu.VMEM((tm, O_pad), jnp.float32)],
        )
        return pl.pallas_call(
            _mlp_kernel,
            out_shape=jax.ShapeDtypeStruct((M, O_pad), out_dtype),
            grid_spec=grid_spec,
            compiler_params=pltpu.CompilerParams(
                dimension_semantics=("parallel", "arbitrary"),
                vmem_limit_bytes=vmem_limit),
        )

    try:
        out = _build(weights_resident)(x2, w1, b1, w2, b2)
    except Exception:
        if not weights_resident:
            raise
        # Fallback for JAX builds that reject single-buffered specs.
        out = _build(False)(x2, w1, b1, w2, b2)

    if O_pad != O:
        out = out[:, :O]
    return out.reshape(lead + (O,))


def init_params(key, in_features, hidden_features=None, out_features=None):
    """Deterministic synthetic params matching nn.Linear shapes.

    Weights are stored as (in, out) matmul layout (i.e. PyTorch weight.T).
    """
    out_features = out_features or in_features
    hidden_features = hidden_features or in_features
    k1, k2, k3, k4 = jax.random.split(key, 4)
    s1 = 1.0 / float(in_features) ** 0.5
    s2 = 1.0 / float(hidden_features) ** 0.5
    return {
        "w1": jax.random.uniform(k1, (in_features, hidden_features), jnp.float32, -s1, s1),
        "b1": jax.random.uniform(k2, (hidden_features,), jnp.float32, -s1, s1),
        "w2": jax.random.uniform(k3, (hidden_features, out_features), jnp.float32, -s2, s2),
        "b2": jax.random.uniform(k4, (out_features,), jnp.float32, -s2, s2),
    }


def _reference(x, params):
    """Pure-JAX f32 reference (same tanh-GELU) for a sanity check."""
    hp = jax.lax.Precision.HIGHEST
    h = _gelu_tanh(jnp.dot(x, params["w1"], precision=hp) + params["b1"])
    return jnp.dot(h, params["w2"], precision=hp) + params["b2"]


if __name__ == "__main__":
    # Small Swin-like shapes: batch=2, 8x8 window of tokens, C=32, mlp_ratio=4.
    B, L, C, Hd = 2, 64, 32, 128

    key = jax.random.PRNGKey(0)
    kx, kp = jax.random.split(key)
    x = jax.random.normal(kx, (B, L, C), jnp.float32)
    params = init_params(kp, C, hidden_features=Hd)

    out = mlp_forward(x, params)
    out = jax.block_until_ready(out)

    ref = _reference(x, params)
    assert out.shape == (B, L, C)
    # bf16 matmuls vs f32 reference -> relaxed tolerance.
    assert jnp.allclose(out, ref, atol=2e-2, rtol=2e-2), "mismatch vs reference"
    print("KERNEL_OK")
</pallas_src>

<mosaic_0001>
module attributes {stable_mosaic.version = 11 : i64} {
  func.func @_mlp_kernel(%arg0: i32, %arg1: i32, %arg2: memref<64x32xbf16, #tpu.memory_space<vmem>>, %arg3: memref<32x128xbf16, #tpu.memory_space<vmem>>, %arg4: memref<1x128xf32, #tpu.memory_space<vmem>>, %arg5: memref<128x128xbf16, #tpu.memory_space<vmem>>, %arg6: memref<1x128xf32, #tpu.memory_space<vmem>>, %arg7: memref<64x128xf32, #tpu.memory_space<vmem>>, %arg8: memref<64x128xf32, #tpu.memory_space<vmem>>) attributes {dimension_semantics = [#tpu.dimension_semantics<parallel>, #tpu.dimension_semantics<arbitrary>], iteration_bounds = array<i64: 2, 1>, scalar_prefetch = 0 : i64, scratch_operands = 1 : i64, tpu.core_type = #tpu.core_type<tc>, window_params = [{transform_indices = @transform_0, window_bounds = array<i64: 64, 32>}, {pipeline_mode = #tpu.pipeline_mode<synchronous>, transform_indices = @transform_1, window_bounds = array<i64: 32, 128>}, {pipeline_mode = #tpu.pipeline_mode<synchronous>, transform_indices = @transform_2, window_bounds = array<i64: 1, 128>}, {pipeline_mode = #tpu.pipeline_mode<synchronous>, transform_indices = @transform_3, window_bounds = array<i64: 128, 128>}, {pipeline_mode = #tpu.pipeline_mode<synchronous>, transform_indices = @transform_4, window_bounds = array<i64: 1, 128>}, {transform_indices = @transform_5, window_bounds = array<i64: 64, 128>}]} {
    %c0_i32 = arith.constant 0 : i32
    %0 = arith.cmpi eq, %arg1, %c0_i32 : i32
    %1 = arith.extui %0 : i1 to i32
    %c0_i32_0 = arith.constant 0 : i32
    %2 = arith.cmpi ne, %1, %c0_i32_0 : i32
    scf.if %2 {
      %cst_19 = arith.constant 0.000000e+00 : f32
      %31 = vector.broadcast %cst_19 : f32 to vector<64x128xf32>
      %c0_20 = arith.constant 0 : index
      %c0_21 = arith.constant 0 : index
      %32 = vector.load %arg8[%c0_20, %c0_21] : memref<64x128xf32, #tpu.memory_space<vmem>>, vector<64x128xf32>
      tpu.vector_store %arg8[%c0_20, %c0_21], %31 {strides = array<i32>} : memref<64x128xf32, #tpu.memory_space<vmem>>, vector<64x128xf32>,
    } else {
    }
    %c0 = arith.constant 0 : index
    %c0_1 = arith.constant 0 : index
    %3 = vector.load %arg2[%c0, %c0_1] : memref<64x32xbf16, #tpu.memory_space<vmem>>, vector<64x32xbf16>
    %c0_2 = arith.constant 0 : index
    %c0_3 = arith.constant 0 : index
    %4 = vector.load %arg3[%c0_2, %c0_3] : memref<32x128xbf16, #tpu.memory_space<vmem>>, vector<32x128xbf16>
    %cst = arith.constant dense<0.000000e+00> : vector<64x128xf32>
    %5 = tpu.matmul %3, %4, %cst {dimension_numbers = #tpu.dot_dimension_numbers<[1], [0], [0], [1], [0, 0, 1, 1], [], []>} : vector<64x32xbf16>, vector<32x128xbf16>, vector<64x128xf32> -> vector<64x128xf32>
    %c0_4 = arith.constant 0 : index
    %c0_5 = arith.constant 0 : index
    %6 = vector.load %arg4[%c0_4, %c0_5] : memref<1x128xf32, #tpu.memory_space<vmem>>, vector<1x128xf32>
    %7 = vector.broadcast %6 : vector<1x128xf32> to vector<64x128xf32>
    %8 = arith.addf %5, %7 : vector<64x128xf32>
    %cst_6 = arith.constant 5.000000e-01 : f32
    %9 = vector.broadcast %cst_6 : f32 to vector<64x128xf32>
    %10 = arith.mulf %9, %8 : vector<64x128xf32>
    %11 = arith.mulf %8, %8 : vector<64x128xf32>
    %12 = arith.mulf %11, %8 : vector<64x128xf32>
    %cst_7 = arith.constant 4.471500e-02 : f32
    %13 = vector.broadcast %cst_7 : f32 to vector<64x128xf32>
    %14 = arith.mulf %13, %12 : vector<64x128xf32>
    %15 = arith.addf %8, %14 : vector<64x128xf32>
    %cst_8 = arith.constant 0.797884583 : f32
    %16 = vector.broadcast %cst_8 : f32 to vector<64x128xf32>
    %17 = arith.mulf %16, %15 : vector<64x128xf32>
    %18 = math.tanh %17 : vector<64x128xf32>
    %cst_9 = arith.constant 1.000000e+00 : f32
    %19 = vector.broadcast %cst_9 : f32 to vector<64x128xf32>
    %20 = arith.addf %19, %18 : vector<64x128xf32>
    %21 = arith.mulf %10, %20 : vector<64x128xf32>
    %c0_10 = arith.constant 0 : index
    %c0_11 = arith.constant 0 : index
    %22 = vector.load %arg8[%c0_10, %c0_11] : memref<64x128xf32, #tpu.memory_space<vmem>>, vector<64x128xf32>
    %23 = arith.truncf %21 : vector<64x128xf32> to vector<64x128xbf16>
    %c0_12 = arith.constant 0 : index
    %c0_13 = arith.constant 0 : index
    %24 = vector.load %arg5[%c0_12, %c0_13] : memref<128x128xbf16, #tpu.memory_space<vmem>>, vector<128x128xbf16>
    %cst_14 = arith.constant dense<0.000000e+00> : vector<64x128xf32>
    %25 = tpu.matmul %23, %24, %cst_14 {dimension_numbers = #tpu.dot_dimension_numbers<[1], [0], [0], [1], [0, 0, 1, 1], [], []>} : vector<64x128xbf16>, vector<128x128xbf16>, vector<64x128xf32> -> vector<64x128xf32>
    %26 = arith.addf %22, %25 : vector<64x128xf32>
    %c0_15 = arith.constant 0 : index
    %c0_16 = arith.constant 0 : index
    %27 = vector.load %arg8[%c0_15, %c0_16] : memref<64x128xf32, #tpu.memory_space<vmem>>, vector<64x128xf32>
    tpu.vector_store %arg8[%c0_15, %c0_16], %26 {strides = array<i32>} : memref<64x128xf32, #tpu.memory_space<vmem>>, vector<64x128xf32>,
    %c0_i32_17 = arith.constant 0 : i32
    %28 = arith.cmpi eq, %arg1, %c0_i32_17 : i32
    %29 = arith.extui %28 : i1 to i32
    %c0_i32_18 = arith.constant 0 : i32
    %30 = arith.cmpi ne, %29, %c0_i32_18 : i32
    scf.if %30 {
      %c0_19 = arith.constant 0 : index
      %c0_20 = arith.constant 0 : index
      %31 = vector.load %arg8[%c0_19, %c0_20] : memref<64x128xf32, #tpu.memory_space<vmem>>, vector<64x128xf32>
      %c0_21 = arith.constant 0 : index
      %c0_22 = arith.constant 0 : index
      %32 = vector.load %arg6[%c0_21, %c0_22] : memref<1x128xf32, #tpu.memory_space<vmem>>, vector<1x128xf32>
      %33 = vector.broadcast %32 : vector<1x128xf32> to vector<64x128xf32>
      %34 = arith.addf %31, %33 : vector<64x128xf32>
      %c0_23 = arith.constant 0 : index
      %c0_24 = arith.constant 0 : index
      %35 = vector.load %arg7[%c0_23, %c0_24] : memref<64x128xf32, #tpu.memory_space<vmem>>, vector<64x128xf32>
      tpu.vector_store %arg7[%c0_23, %c0_24], %34 {strides = array<i32>} : memref<64x128xf32, #tpu.memory_space<vmem>>, vector<64x128xf32>,
    } else {
    }
    return
  }
  func.func @transform_0(%arg0: i32, %arg1: i32) -> (i32, i32) {
    %c0_i32 = arith.constant 0 : i32
    %c0_i32_0 = arith.constant 0 : i32
    return %arg0, %c0_i32 : i32, i32
  }
  func.func @transform_1(%arg0: i32, %arg1: i32) -> (i32, i32) {
    %c0_i32 = arith.constant 0 : i32
    %c0_i32_0 = arith.constant 0 : i32
    return %c0_i32, %arg1 : i32, i32
  }
  func.func @transform_2(%arg0: i32, %arg1: i32) -> (i32, i32) {
    %c0_i32 = arith.constant 0 : i32
    %c0_i32_0 = arith.constant 0 : i32
    return %c0_i32, %arg1 : i32, i32
  }
  func.func @transform_3(%arg0: i32, %arg1: i32) -> (i32, i32) {
    %c0_i32 = arith.constant 0 : i32
    %c0_i32_0 = arith.constant 0 : i32
    return %arg1, %c0_i32 : i32, i32
  }
  func.func @transform_4(%arg0: i32, %arg1: i32) -> (i32, i32) {
    %c0_i32 = arith.constant 0 : i32
    %c0_i32_0 = arith.constant 0 : i32
    %c0_i32_1 = arith.constant 0 : i32
    return %c0_i32, %c0_i32_0 : i32, i32
  }
  func.func @transform_5(%arg0: i32, %arg1: i32) -> (i32, i32) {
    %c0_i32 = arith.constant 0 : i32
    %c0_i32_0 = arith.constant 0 : i32
    return %arg0, %c0_i32 : i32, i32
  }
}

module attributes {stable_mosaic.version = 11 : i64} {
  func.func @_mlp_kernel(%arg0: i32, %arg1: i32, %arg2: memref<64x32xbf16, #tpu.memory_space<vmem>>, %arg3: memref<32x128xbf16, #tpu.memory_space<vmem>>, %arg4: memref<1x128xf32, #tpu.memory_space<vmem>>, %arg5: memref<128x128xbf16, #tpu.memory_space<vmem>>, %arg6: memref<1x128xf32, #tpu.memory_space<vmem>>, %arg7: memref<64x128xf32, #tpu.memory_space<vmem>>, %arg8: memref<64x128xf32, #tpu.memory_space<vmem>>) attributes {dimension_semantics = [#tpu.dimension_semantics<parallel>, #tpu.dimension_semantics<arbitrary>], iteration_bounds = array<i64: 2, 1>, scalar_prefetch = 0 : i64, scratch_operands = 1 : i64, tpu.core_type = #tpu.core_type<tc>, window_params = [{transform_indices = @transform_0, window_bounds = array<i64: 64, 32>}, {transform_indices = @transform_1, window_bounds = array<i64: 32, 128>}, {transform_indices = @transform_2, window_bounds = array<i64: 1, 128>}, {transform_indices = @transform_3, window_bounds = array<i64: 128, 128>}, {pipeline_mode = #tpu.pipeline_mode<synchronous>, transform_indices = @transform_4, window_bounds = array<i64: 1, 128>}, {transform_indices = @transform_5, window_bounds = array<i64: 64, 128>}]} {
    %c0_i32 = arith.constant 0 : i32
    %0 = arith.cmpi eq, %arg1, %c0_i32 : i32
    %1 = arith.extui %0 : i1 to i32
    %c0_i32_0 = arith.constant 0 : i32
    %2 = arith.cmpi ne, %1, %c0_i32_0 : i32
    scf.if %2 {
      %cst_19 = arith.constant 0.000000e+00 : f32
      %31 = vector.broadcast %cst_19 : f32 to vector<64x128xf32>
      %c0_20 = arith.constant 0 : index
      %c0_21 = arith.constant 0 : index
      %32 = vector.load %arg8[%c0_20, %c0_21] : memref<64x128xf32, #tpu.memory_space<vmem>>, vector<64x128xf32>
      tpu.vector_store %arg8[%c0_20, %c0_21], %31 {strides = array<i32>} : memref<64x128xf32, #tpu.memory_space<vmem>>, vector<64x128xf32>,
    } else {
    }
    %c0 = arith.constant 0 : index
    %c0_1 = arith.constant 0 : index
    %3 = vector.load %arg2[%c0, %c0_1] : memref<64x32xbf16, #tpu.memory_space<vmem>>, vector<64x32xbf16>
    %c0_2 = arith.constant 0 : index
    %c0_3 = arith.constant 0 : index
    %4 = vector.load %arg3[%c0_2, %c0_3] : memref<32x128xbf16, #tpu.memory_space<vmem>>, vector<32x128xbf16>
    %cst = arith.constant dense<0.000000e+00> : vector<64x128xf32>
    %5 = tpu.matmul %3, %4, %cst {dimension_numbers = #tpu.dot_dimension_numbers<[1], [0], [0], [1], [0, 0, 1, 1], [], []>} : vector<64x32xbf16>, vector<32x128xbf16>, vector<64x128xf32> -> vector<64x128xf32>
    %c0_4 = arith.constant 0 : index
    %c0_5 = arith.constant 0 : index
    %6 = vector.load %arg4[%c0_4, %c0_5] : memref<1x128xf32, #tpu.memory_space<vmem>>, vector<1x128xf32>
    %7 = vector.broadcast %6 : vector<1x128xf32> to vector<64x128xf32>
    %8 = arith.addf %5, %7 : vector<64x128xf32>
    %cst_6 = arith.constant 5.000000e-01 : f32
    %9 = vector.broadcast %cst_6 : f32 to vector<64x128xf32>
    %10 = arith.mulf %9, %8 : vector<64x128xf32>
    %11 = arith.mulf %8, %8 : vector<64x128xf32>
    %12 = arith.mulf %11, %8 : vector<64x128xf32>
    %cst_7 = arith.constant 4.471500e-02 : f32
    %13 = vector.broadcast %cst_7 : f32 to vector<64x128xf32>
    %14 = arith.mulf %13, %12 : vector<64x128xf32>
    %15 = arith.addf %8, %14 : vector<64x128xf32>
    %cst_8 = arith.constant 0.797884583 : f32
    %16 = vector.broadcast %cst_8 : f32 to vector<64x128xf32>
    %17 = arith.mulf %16, %15 : vector<64x128xf32>
    %18 = math.tanh %17 : vector<64x128xf32>
    %cst_9 = arith.constant 1.000000e+00 : f32
    %19 = vector.broadcast %cst_9 : f32 to vector<64x128xf32>
    %20 = arith.addf %19, %18 : vector<64x128xf32>
    %21 = arith.mulf %10, %20 : vector<64x128xf32>
    %c0_10 = arith.constant 0 : index
    %c0_11 = arith.constant 0 : index
    %22 = vector.load %arg8[%c0_10, %c0_11] : memref<64x128xf32, #tpu.memory_space<vmem>>, vector<64x128xf32>
    %23 = arith.truncf %21 : vector<64x128xf32> to vector<64x128xbf16>
    %c0_12 = arith.constant 0 : index
    %c0_13 = arith.constant 0 : index
    %24 = vector.load %arg5[%c0_12, %c0_13] : memref<128x128xbf16, #tpu.memory_space<vmem>>, vector<128x128xbf16>
    %cst_14 = arith.constant dense<0.000000e+00> : vector<64x128xf32>
    %25 = tpu.matmul %23, %24, %cst_14 {dimension_numbers = #tpu.dot_dimension_numbers<[1], [0], [0], [1], [0, 0, 1, 1], [], []>} : vector<64x128xbf16>, vector<128x128xbf16>, vector<64x128xf32> -> vector<64x128xf32>
    %26 = arith.addf %22, %25 : vector<64x128xf32>
    %c0_15 = arith.constant 0 : index
    %c0_16 = arith.constant 0 : index
    %27 = vector.load %arg8[%c0_15, %c0_16] : memref<64x128xf32, #tpu.memory_space<vmem>>, vector<64x128xf32>
    tpu.vector_store %arg8[%c0_15, %c0_16], %26 {strides = array<i32>} : memref<64x128xf32, #tpu.memory_space<vmem>>, vector<64x128xf32>,
    %c0_i32_17 = arith.constant 0 : i32
    %28 = arith.cmpi eq, %arg1, %c0_i32_17 : i32
    %29 = arith.extui %28 : i1 to i32
    %c0_i32_18 = arith.constant 0 : i32
    %30 = arith.cmpi ne, %29, %c0_i32_18 : i32
    scf.if %30 {
      %c0_19 = arith.constant 0 : index
      %c0_20 = arith.constant 0 : index
      %31 = vector.load %arg8[%c0_19, %c0_20] : memref<64x128xf32, #tpu.memory_space<vmem>>, vector<64x128xf32>
      %c0_21 = arith.constant 0 : index
      %c0_22 = arith.constant 0 : index
      %32 = vector.load %arg6[%c0_21, %c0_22] : memref<1x128xf32, #tpu.memory_space<vmem>>, vector<1x128xf32>
      %33 = vector.broadcast %32 : vector<1x128xf32> to vector<64x128xf32>
      %34 = arith.addf %31, %33 : vector<64x128xf32>
      %c0_23 = arith.constant 0 : index
      %c0_24 = arith.constant 0 : index
      %35 = vector.load %arg7[%c0_23, %c0_24] : memref<64x128xf32, #tpu.memory_space<vmem>>, vector<64x128xf32>
      tpu.vector_store %arg7[%c0_23, %c0_24], %34 {strides = array<i32>} : memref<64x128xf32, #tpu.memory_space<vmem>>, vector<64x128xf32>,
    } else {
    }
    return
  }
  func.func @transform_0(%arg0: i32, %arg1: i32) -> (i32, i32) {
    %c0_i32 = arith.constant 0 : i32
    %c0_i32_0 = arith.constant 0 : i32
    return %arg0, %c0_i32 : i32, i32
  }
  func.func @transform_1(%arg0: i32, %arg1: i32) -> (i32, i32) {
    %c0_i32 = arith.constant 0 : i32
    %c0_i32_0 = arith.constant 0 : i32
    return %c0_i32, %arg1 : i32, i32
  }
  func.func @transform_2(%arg0: i32, %arg1: i32) -> (i32, i32) {
    %c0_i32 = arith.constant 0 : i32
    %c0_i32_0 = arith.constant 0 : i32
    return %c0_i32, %arg1 : i32, i32
  }
  func.func @transform_3(%arg0: i32, %arg1: i32) -> (i32, i32) {
    %c0_i32 = arith.constant 0 : i32
    %c0_i32_0 = arith.constant 0 : i32
    return %arg1, %c0_i32 : i32, i32
  }
  func.func @transform_4(%arg0: i32, %arg1: i32) -> (i32, i32) {
    %c0_i32 = arith.constant 0 : i32
    %c0_i32_0 = arith.constant 0 : i32
    %c0_i32_1 = arith.constant 0 : i32
    return %c0_i32, %c0_i32_0 : i32, i32
  }
  func.func @transform_5(%arg0: i32, %arg1: i32) -> (i32, i32) {
    %c0_i32 = arith.constant 0 : i32
    %c0_i32_0 = arith.constant 0 : i32
    return %arg0, %c0_i32 : i32, i32
  }
}

</mosaic_0001>

<llo_original>
// kernel: tpu_custom_call.1
$region0: #{tpu_custom_call.1}
  #allocation0 [shape = 'u32[]', space=smem, size = 0x4, offset = 0x4, fixed_abs, tag = 'smem constant byte address 0x4 - core index']
  #allocation1 [shape = 'u32[144,128]{1,0:T(1,128)}', space=vmem, size = 0x12000, scoped, tag = 'internal scratch']
  #allocation2 [shape = 'f32[64,128]{1,0:T(8,128)}', space=vmem, size = 0x8000, scoped, tag = 'scratch operand']
  %s0 = inlined_call_operand.vmem [shape: bf16[128,32], index: 0, kind: input, shape index: {}]
  %s1 = inlined_call_operand.vmem [shape: bf16[32,128], index: 1, kind: input, shape index: {}]
  %s2 = inlined_call_operand.vmem [shape: f32[1,128], index: 2, kind: input, shape index: {}]
  %s3 = inlined_call_operand.vmem [shape: bf16[128,128], index: 3, kind: input, shape index: {}]
  %s4 = inlined_call_operand.vmem [shape: f32[1,128], index: 4, kind: input, shape index: {}]
  %s5 = inlined_call_operand.hbm [shape: f32[128,128], index: 5, kind: output, shape index: {}]
  %s6 = sld [smem:[#allocation0]]
  $region61: #{tpu_custom_call.1} parent=0
    _
  %s8 = ssub.s32 1, %s6
  %s9 = scalar_select 0, %s8, %s6
  $region1: #{tpu_custom_call.1} parent=0
    #allocation3 [shape = 'u8[65536]{0}', space=vmem, size = 0x10000, scoped, tag = 'output window, operand 0']
    #allocation4 [shape = 's32[2]{0}', space=sflag, size = 0x8, scoped, tag = 'scoped memory for tpu_custom_call.1']
    %10 = vsyncpa [#allocation4], 0
    %s11 = scalar_lea.sflag [#allocation4], 1
    %12 = vsyncpa %s11, 0
    loop: start=0, step=1, limit=4
    $region2: #{tpu_custom_call.1} parent=1 // loop_pre_header
      _
    $region3: #{tpu_custom_call.1} parent=1 // loop_header
      %s14 = sphi 0, %s18
      %p15 = scmp.ge.s32.totalorder %s14, 4
      %s21 = sphi 0, %s33
      %s22 = sphi 0, %s29
      %s23 = sphi 0, %s21
      %s24 = sphi 0, %s22
      %s25 = sphi 0, %s23
      %s26 = sphi 0, %s24
      %s36 = sphi 0, %s38
      %s39 = sphi 0, %s36
      %s40 = sphi 0, %s39
      %s56 = sphi 0, %s40
      %s62 = sphi 0, %s64
      %s65 = sphi 0, %s62
      %s66 = sphi 0, %s65
      %s82 = sphi 0, %s66
      %s88 = sphi 0, %s90
      %s91 = sphi 0, %s88
      %s92 = sphi 0, %s91
      %s108 = sphi 0, %s92
      %s114 = sphi 0, %s116
      %s117 = sphi 0, %s114
      %s118 = sphi 0, %s117
      %s134 = sphi 0, %s118
      %s138 = sphi 0, %s138
      %s140 = sphi 0, %s138
      %s141 = sphi 0, %s140
      %s155 = sphi 0, %s141
      %s161 = sphi 0, %s163
      %s164 = sphi 0, %s161
      %s165 = sphi 0, %s164
      %s181 = sphi 0, %s165
    $region4: #{tpu_custom_call.1} parent=1 // loop_header_branch
      %17 = sbr.rel (%p15) target = $region8
    $region5: #{tpu_custom_call.1} parent=1 // loop_body
      %s19 = ssub.s32 %s14, 1
      %s20 = ssub.s32 %s14, 2
      %s27 = sadd.s32 1, %s22
      %p28 = scmp.ge.s32.totalorder %s27, 1
      %s29 = scalar_select %p28, 0, %s27
      %s30 = sadd.s32 1, %s21
      %s31 = scalar_select %p28, %s30, %s21
      %p32 = scmp.ge.s32.totalorder %s31, 2
      %s33 = scalar_select %p32, 0, %s31
      %s34 = ssub.s32 %s21, %s33
      %p35 = scmp.eq.s32.totalorder %s34, 0
      %s37 = sadd.s32 %s36, 1
      %s38 = scalar_select %p35, %s36, %s37
      %p41 = pneg %p35
      %p42 = scmp.eq.s32.totalorder %s14, 1
      %p43 = por %p41, %p42
      %p44 = scmp.ne.s32.totalorder %s36, %s39
      %p45 = scmp.eq.s32.totalorder %s14, 0
      %p46 = por %p44, %p45
      %p47 = scmp.ne.s32.totalorder %s36, %s39
      %p48 = scmp.eq.s32.totalorder %s19, 1
      %p49 = por %p47, %p48
      %p50 = scmp.ne.s32.totalorder %s39, %s40
      %p51 = scmp.eq.s32.totalorder %s19, 0
      %p52 = por %p50, %p51
      %p53 = scmp.ne.s32.totalorder %s39, %s40
      %p54 = scmp.eq.s32.totalorder %s20, 1
      %p55 = por %p53, %p54
      %p57 = scmp.ne.s32.totalorder %s40, %s56
      %p58 = scmp.eq.s32.totalorder %s20, 0
      %p59 = por %p57, %p58
      %s60 = ssub.s32 %s22, %s29
      %p61 = scmp.eq.s32.totalorder %s60, 0
      %s63 = sadd.s32 %s62, 1
      %s64 = scalar_select %p61, %s62, %s63
      %p67 = pneg %p61
      %p68 = scmp.eq.s32.totalorder %s14, 1
      %p69 = por %p67, %p68
      %p70 = scmp.ne.s32.totalorder %s62, %s65
      %p71 = scmp.eq.s32.totalorder %s14, 0
      %p72 = por %p70, %p71
      %p73 = scmp.ne.s32.totalorder %s62, %s65
      %p74 = scmp.eq.s32.totalorder %s19, 1
      %p75 = por %p73, %p74
      %p76 = scmp.ne.s32.totalorder %s65, %s66
      %p77 = scmp.eq.s32.totalorder %s19, 0
      %p78 = por %p76, %p77
      %p79 = scmp.ne.s32.totalorder %s65, %s66
      %p80 = scmp.eq.s32.totalorder %s20, 1
      %p81 = por %p79, %p80
      %p83 = scmp.ne.s32.totalorder %s66, %s82
      %p84 = scmp.eq.s32.totalorder %s20, 0
      %p85 = por %p83, %p84
      %s86 = ssub.s32 %s22, %s29
      %p87 = scmp.eq.s32.totalorder %s86, 0
      %s89 = sadd.s32 %s88, 1
      %s90 = scalar_select %p87, %s88, %s89
      %p93 = pneg %p87
      %p94 = scmp.eq.s32.totalorder %s14, 1
      %p95 = por %p93, %p94
      %p96 = scmp.ne.s32.totalorder %s88, %s91
      %p97 = scmp.eq.s32.totalorder %s14, 0
      %p98 = por %p96, %p97
      %p99 = scmp.ne.s32.totalorder %s88, %s91
      %p100 = scmp.eq.s32.totalorder %s19, 1
      %p101 = por %p99, %p100
      %p102 = scmp.ne.s32.totalorder %s91, %s92
      %p103 = scmp.eq.s32.totalorder %s19, 0
      %p104 = por %p102, %p103
      %p105 = scmp.ne.s32.totalorder %s91, %s92
      %p106 = scmp.eq.s32.totalorder %s20, 1
      %p107 = por %p105, %p106
      %p109 = scmp.ne.s32.totalorder %s92, %s108
      %p110 = scmp.eq.s32.totalorder %s20, 0
      %p111 = por %p109, %p110
      %s112 = ssub.s32 %s22, %s29
      %p113 = scmp.eq.s32.totalorder %s112, 0
      %s115 = sadd.s32 %s114, 1
      %s116 = scalar_select %p113, %s114, %s115
      %p119 = pneg %p113
      %p120 = scmp.eq.s32.totalorder %s14, 1
      %p121 = por %p119, %p120
      %p122 = scmp.ne.s32.totalorder %s114, %s117
      %p123 = scmp.eq.s32.totalorder %s14, 0
      %p124 = por %p122, %p123
      %p125 = scmp.ne.s32.totalorder %s114, %s117
      %p126 = scmp.eq.s32.totalorder %s19, 1
      %p127 = por %p125, %p126
      %p128 = scmp.ne.s32.totalorder %s117, %s118
      %p129 = scmp.eq.s32.totalorder %s19, 0
      %p130 = por %p128, %p129
      %p131 = scmp.ne.s32.totalorder %s117, %s118
      %p132 = scmp.eq.s32.totalorder %s20, 1
      %p133 = por %p131, %p132
      %p135 = scmp.ne.s32.totalorder %s118, %s134
      %p136 = scmp.eq.s32.totalorder %s20, 0
      %p137 = por %p135, %p136
      %s139 = sadd.s32 %s138, 1
      %p142 = scmp.eq.s32.totalorder %s14, 1
      %p143 = scmp.ne.s32.totalorder %s138, %s140
      %p144 = scmp.eq.s32.totalorder %s14, 0
      %p145 = por %p143, %p144
      %p146 = scmp.ne.s32.totalorder %s138, %s140
      %p147 = scmp.eq.s32.totalorder %s19, 1
      %p148 = por %p146, %p147
      %p149 = scmp.ne.s32.totalorder %s140, %s141
      %p150 = scmp.eq.s32.totalorder %s19, 0
      %p151 = por %p149, %p150
      %p152 = scmp.ne.s32.totalorder %s140, %s141
      %p153 = scmp.eq.s32.totalorder %s20, 1
      %p154 = por %p152, %p153
      %p156 = scmp.ne.s32.totalorder %s141, %s155
      %p157 = scmp.eq.s32.totalorder %s20, 0
      %p158 = por %p156, %p157
      %s159 = ssub.s32 %s21, %s33
      %p160 = scmp.eq.s32.totalorder %s159, 0
      %s162 = sadd.s32 %s161, 1
      %s163 = scalar_select %p160, %s161, %s162
      %p166 = pneg %p160
      %p167 = scmp.eq.s32.totalorder %s14, 1
      %p168 = por %p166, %p167
      %p169 = scmp.ne.s32.totalorder %s161, %s164
      %p170 = scmp.eq.s32.totalorder %s14, 0
      %p171 = por %p169, %p170
      %p172 = scmp.ne.s32.totalorder %s161, %s164
      %p173 = scmp.eq.s32.totalorder %s19, 1
      %p174 = por %p172, %p173
      %p175 = scmp.ne.s32.totalorder %s164, %s165
      %p176 = scmp.eq.s32.totalorder %s19, 0
      %p177 = por %p175, %p176
      %p178 = scmp.ne.s32.totalorder %s164, %s165
      %p179 = scmp.eq.s32.totalorder %s20, 1
      %p180 = por %p178, %p179
      %p182 = scmp.ne.s32.totalorder %s165, %s181
      %p183 = scmp.eq.s32.totalorder %s20, 0
      %p184 = por %p182, %p183
      %p185 = scmp.le.s32.totalorder 1, %s14
      %p186 = scmp.lt.s32.totalorder %s14, 3
      %p187 = pnand %p185, %p186
      %p188 = pneg %p187
      // Predicated region
      $region9: #{tpu_custom_call.1} parent=5 // pred_check
        _
      $region10: #{tpu_custom_call.1} parent=5 // pred_check_branch
        %190 = sbr.rel (%p187) target = $region12
      $region11: #{tpu_custom_call.1} parent=5 // pred_region
        %s191 = ssub.s32 %s14, 1
        // Predicated region
        $region13: #{tpu_custom_call.1} parent=11 // pred_check
          %p192 = pneg %p78
        $region14: #{tpu_custom_call.1} parent=11 // pred_check_branch
          %194 = sbr.rel (%p192) target = $region16
        $region15: #{tpu_custom_call.1} parent=11 // pred_region
          %p195 = scmp.lt.s32.totalorder %s24, 0
          %s196 = scalar_select %p195, %s24, 0
          %s197 = smul.addr %s196, 4
          %s198 = scalar_lea.vmem %s1, %s197
        $region16: #{tpu_custom_call.1} parent=11 // pred_fallthru
          _
        // Predicated region
        $region17: #{tpu_custom_call.1} parent=11 // pred_check
          %p199 = pneg %p104
        $region18: #{tpu_custom_call.1} parent=11 // pred_check_branch
          %201 = sbr.rel (%p199) target = $region20
        $region19: #{tpu_custom_call.1} parent=11 // pred_region
          %p202 = scmp.lt.s32.totalorder %s24, 0
          %s203 = scalar_select %p202, %s24, 0
          %s204 = scalar_lea.vmem %s2, %s203
        $region20: #{tpu_custom_call.1} parent=11 // pred_fallthru
          _
        // Predicated region
        $region21: #{tpu_custom_call.1} parent=11 // pred_check
          %p205 = pneg %p130
        $region22: #{tpu_custom_call.1} parent=11 // pred_check_branch
          %207 = sbr.rel (%p205) target = $region24
        $region23: #{tpu_custom_call.1} parent=11 // pred_region
          %s208 = smul.u32 16, %s24
          %p209 = scmp.lt.s32.totalorder %s208, 15
          %s210 = scalar_select %p209, %s208, 15
          %s211 = smul.addr %s210, 4
          %s212 = scalar_lea.vmem %s3, %s211
          %s213 = smul.u32 16, %s24
        $region24: #{tpu_custom_call.1} parent=11 // pred_fallthru
          _
        // Predicated region
        $region25: #{tpu_custom_call.1} parent=11 // pred_check
          %p214 = pneg %p151
        $region26: #{tpu_custom_call.1} parent=11 // pred_check_branch
          %216 = sbr.rel (%p214) target = $region28
        $region27: #{tpu_custom_call.1} parent=11 // pred_region
          _
        $region28: #{tpu_custom_call.1} parent=11 // pred_fallthru
          _
      $region12: #{tpu_custom_call.1} parent=5 // pred_fallthru
        _
      %p217 = scmp.lt.s32.totalorder %s14, 2
      // Predicated region
      $region29: #{tpu_custom_call.1} parent=5 // pred_check
        %p218 = pneg %p217
      $region30: #{tpu_custom_call.1} parent=5 // pred_check_branch
        %220 = sbr.rel (%p218) target = $region32
      $region31: #{tpu_custom_call.1} parent=5 // pred_region
        // Predicated region
        $region33: #{tpu_custom_call.1} parent=31 // pred_check
          %p221 = pneg %p46
        $region34: #{tpu_custom_call.1} parent=31 // pred_check_branch
          %223 = sbr.rel (%p221) target = $region36
        $region35: #{tpu_custom_call.1} parent=31 // pred_region
          %s224 = smul.u32 8, %s21
          %p225 = scmp.lt.s32.totalorder %s224, 15
          %s226 = scalar_select %p225, %s224, 15
          %s227 = smul.addr %s226, 4
          %s228 = scalar_lea.vmem %s0, %s227
          %s229 = smul.u32 8, %s21
        $region36: #{tpu_custom_call.1} parent=31 // pred_fallthru
          _
      $region32: #{tpu_custom_call.1} parent=5 // pred_fallthru
        _
      %p230 = scmp.le.s32.totalorder 1, %s14
      %p231 = scmp.lt.s32.totalorder %s14, 3
      %p232 = pnand %p230, %p231
      %p233 = pneg %p232
      // Predicated region
      $region37: #{tpu_custom_call.1} parent=5 // pred_check
        _
      $region38: #{tpu_custom_call.1} parent=5 // pred_check_branch
        %235 = sbr.rel (%p232) target = $region40
      $region39: #{tpu_custom_call.1} parent=5 // pred_region
        %s236 = ssub.s32 %s14, 1
        %s237 = smul.u32 8, %s23
        %p238 = scmp.lt.s32.totalorder %s237, 15
        %s239 = scalar_select %p238, %s237, 15
        %s240 = smul.addr %s239, 4
        %s241 = scalar_lea.vmem %s0, %s240
        %p242 = pneg %p52
        %p243 = pneg %p49
        %p244 = scmp.lt.s32.totalorder %s24, 0
        %s245 = scalar_select %p244, %s24, 0
        %s246 = smul.addr %s245, 4
        %s247 = scalar_lea.vmem %s1, %s246
        %p248 = pneg %p78
        %p249 = pneg %p75
        %p250 = scmp.lt.s32.totalorder %s24, 0
        %s251 = scalar_select %p250, %s24, 0
        %s252 = scalar_lea.vmem %s2, %s251
        %p253 = pneg %p104
        %p254 = pneg %p101
        %s255 = smul.u32 16, %s24
        %p256 = scmp.lt.s32.totalorder %s255, 15
        %s257 = scalar_select %p256, %s255, 15
        %s258 = smul.addr %s257, 4
        %s259 = scalar_lea.vmem %s3, %s258
        %p260 = pneg %p130
        %p261 = pneg %p127
        %p262 = pneg %p151
        %p263 = pneg %p148
        %p264 = pneg %p177
        %p265 = pneg %p174
        %s266 = sand.u32 %s164, 1
        %s267 = scalar_lea.sflag [#allocation4], %s266
        %s268 = sand.u32 %s164, 1
        %s269 = smul.addr %s268, 64
        %s270 = scalar_lea.vmem [#allocation3], %s269
        %s271 = smul.u32 8, %s23
        %p272 = scmp.lt.s32.totalorder %s271, 15
        %s273 = scalar_select %p272, %s271, 15
        %s274 = smul.addr %s273, 4
        %s275 = scalar_lea.vmem %s0, %s274
        %s276 = smul.u32 8, %s23
        %p277 = scmp.lt.s32.totalorder %s24, 0
        %s278 = scalar_select %p277, %s24, 0
        %s279 = smul.addr %s278, 4
        %s280 = scalar_lea.vmem %s1, %s279
        %p281 = scmp.lt.s32.totalorder %s24, 0
        %s282 = scalar_select %p281, %s24, 0
        %s283 = scalar_lea.vmem %s2, %s282
        %s284 = smul.u32 16, %s24
        %p285 = scmp.lt.s32.totalorder %s284, 15
        %s286 = scalar_select %p285, %s284, 15
        %s287 = smul.addr %s286, 4
        %s288 = scalar_lea.vmem %s3, %s287
        %s289 = smul.u32 16, %s24
        %s290 = smul.u32 8, %s23
        %p292 = scmp.eq.s32.totalorder %s24, 0
        // Predicated region
        $region41: #{tpu_custom_call.1} parent=39 // pred_check
          %p293 = pneg %p292
        $region42: #{tpu_custom_call.1} parent=39 // pred_check_branch
          %295 = sbr.rel (%p293) target = $region44
        $region43: #{tpu_custom_call.1} parent=39 // pred_region
          %296 = vst [vmem:[#allocation2] sm:$0xff] 0.0
          %297 = vst [vmem:[#allocation2 + $0x8] sm:$0xff] 0.0
          %298 = vst [vmem:[#allocation2 + $0x10] sm:$0xff] 0.0
          %299 = vst [vmem:[#allocation2 + $0x18] sm:$0xff] 0.0
          %300 = vst [vmem:[#allocation2 + $0x20] sm:$0xff] 0.0
          %301 = vst [vmem:[#allocation2 + $0x28] sm:$0xff] 0.0
          %302 = vst [vmem:[#allocation2 + $0x30] sm:$0xff] 0.0
          %303 = vst [vmem:[#allocation2 + $0x38] sm:$0xff] 0.0
        $region44: #{tpu_custom_call.1} parent=39 // pred_fallthru
          _
        %v304 = vld [vmem:[%s275] sm:$0xf]
        %v305 = vld [vmem:[%s275 + $0x4] sm:$0xf]
        %v306 = vld [vmem:[%s275 + $0x8] sm:$0xf]
        %v307 = vld [vmem:[%s275 + $0xc] sm:$0xf]
        %v308 = vld [vmem:[%s275 + $0x10] sm:$0xf]
        %v309 = vld [vmem:[%s275 + $0x14] sm:$0xf]
        %v310 = vld [vmem:[%s275 + $0x18] sm:$0xf]
        %v311 = vld [vmem:[%s275 + $0x1c] sm:$0xf]
        %v312 = vld [vmem:[%s280] sm:$0xf]
        %v313 = vld [vmem:[%s280 + $0x4] sm:$0xf]
        %v314 = vld [vmem:[%s280 + $0x8] sm:$0xf]
        %v315 = vld [vmem:[%s280 + $0xc] sm:$0xf]
        %v316 = vld [vmem:[%s283] sm:$0x1]
        %v318 = vlaneseq
        %v319 = vshrl.u32 %v318, 7
        %v320 = vsub.s32 0, %v319
        %v321 = vrot.slane %v316, %v320
        %v331 = vunpack.c.l.b16 %v304
        %v332 = vunpack.c.l.b16 %v305
        %v333 = vunpack.c.l.b16 %v306
        %v334 = vunpack.c.l.b16 %v307
        %v335 = vunpack.c.l.b16 %v308
        %v336 = vunpack.c.l.b16 %v309
        %v337 = vunpack.c.l.b16 %v310
        %v338 = vunpack.c.l.b16 %v311
        %v339 = vpack.c.b16 %v332, %v331
        %v340 = vpack.c.b16 %v334, %v333
        %v341 = vpack.c.b16 %v336, %v335
        %v342 = vpack.c.b16 %v338, %v337
        %v347 = vunpack.c.l.b16 %v312
        %v348 = vunpack.c.l.b16 %v313
        %v349 = vunpack.c.l.b16 %v314
        %v350 = vunpack.c.l.b16 %v315
        %v351 = vpack.c.b16 %v348, %v347
        %v352 = vpack.c.b16 %v350, %v349
        %vm355 = vcmask 261120
        %v357 = vsel %vm355, %v339, 0
        %v360 = vsel %vm355, %v340, 0
        %v363 = vsel %vm355, %v341, 0
        %v366 = vsel %vm355, %v342, 0
        %368 = vmatprep.subr.bf16.mxu0 0
        %369 = vmatpush1.bf16.msra.mxu0 0
        %370 = vmatprep.subr.bf16.mxu0 0
        %371 = vmatpush1.bf16.msra.mxu0 0
        %372 = vmatprep.subr.bf16.mxu0 0
        %373 = vmatpush1.bf16.msra.mxu0 0
        %374 = vmatprep.subr.bf16.mxu0 0
        %375 = vmatpush1.bf16.msra.mxu0 0
        %376 = vmatprep.subr.bf16.mxu0 0
        %377 = vmatpush1.bf16.msra.mxu0 0
        %378 = vmatprep.subr.bf16.mxu0 0
        %379 = vmatpush1.bf16.msra.mxu0 0
        %380 = vmatprep.subr.bf16.mxu0 0
        %381 = vmatpush1.bf16.msra.mxu0 %v352
        %382 = vmatprep.subr.bf16.mxu0 0
        %383 = vmatpush1.bf16.msra.mxu0 %v351
        %384 = vmatprep.subr.bf16.mxu0 0
        %385 = vmatpush2.bf16.msra.mxu0 0
        %386 = vmatprep.subr.bf16.mxu0 0
        %387 = vmatpush2.bf16.msra.mxu0 0
        %388 = vmatprep.subr.bf16.mxu0 0
        %389 = vmatpush2.bf16.msra.mxu0 0
        %390 = vmatprep.subr.bf16.mxu0 0
        %391 = vmatpush2.bf16.msra.mxu0 0
        %392 = vmatprep.subr.bf16.mxu0 0
        %393 = vmatpush2.bf16.msra.mxu0 0
        %394 = vmatprep.subr.bf16.mxu0 0
        %395 = vmatpush2.bf16.msra.mxu0 0
        %396 = vmatprep.subr.bf16.mxu0 0
        %397 = vmatpush2.bf16.msra.mxu0 0
        %398 = vmatprep.subr.bf16.mxu0 0
        %399 = vmatpush2.bf16.msra.mxu0 0
        %400 = vmatprep.mubr.bf16.mxu0 0
        %401 = vmatmul.mubr.bf16.gmra.mxu0 %v357
        %v402 = vpop.f32.mrf.mxu0
        %v403 = vadd.f32 %v321, %v402
        %v404 = vpop.f32.mrf.mxu0
        %v405 = vpop.f32.mrf.mxu0
        %v406 = vadd.f32 %v321, %v405
        %v407 = vpop.f32.mrf.mxu0
        %408 = vmatprep.mubr.bf16.mxu0 0
        %409 = vmatmul.mubr.bf16.gmra.mxu0 %v360
        %v410 = vpop.f32.mrf.mxu0
        %v411 = vadd.f32 %v321, %v410
        %v412 = vpop.f32.mrf.mxu0
        %v413 = vpop.f32.mrf.mxu0
        %v414 = vadd.f32 %v321, %v413
        %v415 = vpop.f32.mrf.mxu0
        %416 = vmatprep.mubr.bf16.mxu0 0
        %417 = vmatmul.mubr.bf16.gmra.mxu0 %v363
        %v418 = vpop.f32.mrf.mxu0
        %v419 = vadd.f32 %v321, %v418
        %v420 = vpop.f32.mrf.mxu0
        %v421 = vpop.f32.mrf.mxu0
        %v422 = vadd.f32 %v321, %v421
        %v423 = vpop.f32.mrf.mxu0
        %424 = vmatprep.mubr.bf16.mxu0 0
        %425 = vmatmul.mubr.bf16.gmra.mxu0 %v366
        %v426 = vpop.f32.mrf.mxu0
        %v427 = vadd.f32 %v321, %v426
        %v428 = vpop.f32.mrf.mxu0
        %v429 = vpop.f32.mrf.mxu0
        %v430 = vadd.f32 %v321, %v429
        %v431 = vpop.f32.mrf.mxu0
        %432 = vdwg.mxu0
        %v433 = vmul.f32 %v403, 0.5
        %v434 = vmul.f32 %v406, 0.5
        %v435 = vmul.f32 %v411, 0.5
        %v436 = vmul.f32 %v414, 0.5
        %v437 = vmul.f32 %v419, 0.5
        %v438 = vmul.f32 %v422, 0.5
        %v439 = vmul.f32 %v427, 0.5
        %v440 = vmul.f32 %v430, 0.5
        %v441 = vmul.f32 %v403, %v403
        %v442 = vmul.f32 %v406, %v406
        %v443 = vmul.f32 %v411, %v411
        %v444 = vmul.f32 %v414, %v414
        %v445 = vmul.f32 %v419, %v419
        %v446 = vmul.f32 %v422, %v422
        %v447 = vmul.f32 %v427, %v427
        %v448 = vmul.f32 %v430, %v430
        %v449 = vmul.f32 %v441, %v403
        %v450 = vmul.f32 %v442, %v406
        %v451 = vmul.f32 %v443, %v411
        %v452 = vmul.f32 %v444, %v414
        %v453 = vmul.f32 %v445, %v419
        %v454 = vmul.f32 %v446, %v422
        %v455 = vmul.f32 %v447, %v427
        %v456 = vmul.f32 %v448, %v430
        %v457 = vmul.f32 %v449, 0.044715
        %v458 = vmul.f32 %v450, 0.044715
        %v459 = vmul.f32 %v451, 0.044715
        %v460 = vmul.f32 %v452, 0.044715
        %v461 = vmul.f32 %v453, 0.044715
        %v462 = vmul.f32 %v454, 0.044715
        %v463 = vmul.f32 %v455, 0.044715
        %v464 = vmul.f32 %v456, 0.044715
        %v465 = vadd.f32 %v403, %v457
        %v466 = vadd.f32 %v406, %v458
        %v467 = vadd.f32 %v411, %v459
        %v468 = vadd.f32 %v414, %v460
        %v469 = vadd.f32 %v419, %v461
        %v470 = vadd.f32 %v422, %v462
        %v471 = vadd.f32 %v427, %v463
        %v472 = vadd.f32 %v430, %v464
        %v473 = vmul.f32 %v465, 0.7978846
        %v474 = vmul.f32 %v466, 0.7978846
        %v475 = vmul.f32 %v467, 0.7978846
        %v476 = vmul.f32 %v468, 0.7978846
        %v477 = vmul.f32 %v469, 0.7978846
        %v478 = vmul.f32 %v470, 0.7978846
        %v479 = vmul.f32 %v471, 0.7978846
        %v480 = vmul.f32 %v472, 0.7978846
        %v481 = vtanh.pop %v473
        %v482 = vtanh.pop %v474
        %v483 = vtanh.pop %v475
        %v484 = vtanh.pop %v476
        %v485 = vtanh.pop %v477
        %v486 = vtanh.pop %v478
        %v487 = vtanh.pop %v479
        %v488 = vtanh.pop %v480
        %v489 = vadd.f32 %v481, 1.0
        %v490 = vadd.f32 %v482, 1.0
        %v491 = vadd.f32 %v483, 1.0
        %v492 = vadd.f32 %v484, 1.0
        %v493 = vadd.f32 %v485, 1.0
        %v494 = vadd.f32 %v486, 1.0
        %v495 = vadd.f32 %v487, 1.0
        %v496 = vadd.f32 %v488, 1.0
        %v497 = vmul.f32 %v433, %v489
        %v498 = vmul.f32 %v434, %v490
        %v499 = vmul.f32 %v435, %v491
        %v500 = vmul.f32 %v436, %v492
        %v501 = vmul.f32 %v437, %v493
        %v502 = vmul.f32 %v438, %v494
        %v503 = vmul.f32 %v439, %v495
        %v504 = vmul.f32 %v440, %v496
        %v505 = vld [vmem:[#allocation2] sm:$0xff]
        %v506 = vld [vmem:[#allocation2 + $0x8] sm:$0xff]
        %v507 = vld [vmem:[#allocation2 + $0x10] sm:$0xff]
        %v508 = vld [vmem:[#allocation2 + $0x18] sm:$0xff]
        %v509 = vld [vmem:[#allocation2 + $0x20] sm:$0xff]
        %v510 = vld [vmem:[#allocation2 + $0x28] sm:$0xff]
        %v511 = vld [vmem:[#allocation2 + $0x30] sm:$0xff]
        %v512 = vld [vmem:[#allocation2 + $0x38] sm:$0xff]
        %v513 = vpack.c.bf16 %v498, %v497
        %v514 = vpack.c.bf16 %v500, %v499
        %v515 = vpack.c.bf16 %v502, %v501
        %v516 = vpack.c.bf16 %v504, %v503
        %v517 = vld [vmem:[%s288] sm:$0xf]
        %v518 = vld [vmem:[%s288 + $0x4] sm:$0xf]
        %v519 = vld [vmem:[%s288 + $0x8] sm:$0xf]
        %v520 = vld [vmem:[%s288 + $0xc] sm:$0xf]
        %v521 = vld [vmem:[%s288 + $0x10] sm:$0xf]
        %v522 = vld [vmem:[%s288 + $0x14] sm:$0xf]
        %v523 = vld [vmem:[%s288 + $0x18] sm:$0xf]
        %v524 = vld [vmem:[%s288 + $0x1c] sm:$0xf]
        %v525 = vld [vmem:[%s288 + $0x20] sm:$0xf]
        %v526 = vld [vmem:[%s288 + $0x24] sm:$0xf]
        %v527 = vld [vmem:[%s288 + $0x28] sm:$0xf]
        %v528 = vld [vmem:[%s288 + $0x2c] sm:$0xf]
        %v529 = vld [vmem:[%s288 + $0x30] sm:$0xf]
        %v530 = vld [vmem:[%s288 + $0x34] sm:$0xf]
        %v531 = vld [vmem:[%s288 + $0x38] sm:$0xf]
        %v532 = vld [vmem:[%s288 + $0x3c] sm:$0xf]
        %v549 = vunpack.c.l.b16 %v517
        %v550 = vunpack.c.l.b16 %v518
        %v551 = vunpack.c.l.b16 %v519
        %v552 = vunpack.c.l.b16 %v520
        %v553 = vunpack.c.l.b16 %v521
        %v554 = vunpack.c.l.b16 %v522
        %v555 = vunpack.c.l.b16 %v523
        %v556 = vunpack.c.l.b16 %v524
        %v557 = vunpack.c.l.b16 %v525
        %v558 = vunpack.c.l.b16 %v526
        %v559 = vunpack.c.l.b16 %v527
        %v560 = vunpack.c.l.b16 %v528
        %v561 = vunpack.c.l.b16 %v529
        %v562 = vunpack.c.l.b16 %v530
        %v563 = vunpack.c.l.b16 %v531
        %v564 = vunpack.c.l.b16 %v532
        %v565 = vpack.c.b16 %v550, %v549
        %v566 = vpack.c.b16 %v552, %v551
        %v567 = vpack.c.b16 %v554, %v553
        %v568 = vpack.c.b16 %v556, %v555
        %v569 = vpack.c.b16 %v558, %v557
        %v570 = vpack.c.b16 %v560, %v559
        %v571 = vpack.c.b16 %v562, %v561
        %v572 = vpack.c.b16 %v564, %v563
        %581 = vmatprep.subr.bf16.mxu0 0
        %582 = vmatpush1.bf16.msra.mxu0 %v572
        %583 = vmatprep.subr.bf16.mxu0 0
        %584 = vmatpush1.bf16.msra.mxu0 %v571
        %585 = vmatprep.subr.bf16.mxu0 0
        %586 = vmatpush1.bf16.msra.mxu0 %v570
        %587 = vmatprep.subr.bf16.mxu0 0
        %588 = vmatpush1.bf16.msra.mxu0 %v569
        %589 = vmatprep.subr.bf16.mxu0 0
        %590 = vmatpush1.bf16.msra.mxu0 %v568
        %591 = vmatprep.subr.bf16.mxu0 0
        %592 = vmatpush1.bf16.msra.mxu0 %v567
        %593 = vmatprep.subr.bf16.mxu0 0
        %594 = vmatpush1.bf16.msra.mxu0 %v566
        %595 = vmatprep.subr.bf16.mxu0 0
        %596 = vmatpush1.bf16.msra.mxu0 %v565
        %597 = vmatprep.subr.bf16.mxu0 0
        %598 = vmatpush2.bf16.msra.mxu0 0
        %599 = vmatprep.subr.bf16.mxu0 0
        %600 = vmatpush2.bf16.msra.mxu0 0
        %601 = vmatprep.subr.bf16.mxu0 0
        %602 = vmatpush2.bf16.msra.mxu0 0
        %603 = vmatprep.subr.bf16.mxu0 0
        %604 = vmatpush2.bf16.msra.mxu0 0
        %605 = vmatprep.subr.bf16.mxu0 0
        %606 = vmatpush2.bf16.msra.mxu0 0
        %607 = vmatprep.subr.bf16.mxu0 0
        %608 = vmatpush2.bf16.msra.mxu0 0
        %609 = vmatprep.subr.bf16.mxu0 0
        %610 = vmatpush2.bf16.msra.mxu0 0
        %611 = vmatprep.subr.bf16.mxu0 0
        %612 = vmatpush2.bf16.msra.mxu0 0
        %613 = vmatprep.mubr.bf16.mxu0 0
        %614 = vmatmul.mubr.bf16.gmra.mxu0 %v513
        %v615 = vpop.f32.mrf.mxu0
        %v616 = vadd.f32 0.0, %v615
        %v617 = vpop.f32.mrf.mxu0
        %v618 = vpop.f32.mrf.mxu0
        %v619 = vadd.f32 0.0, %v618
        %v620 = vpop.f32.mrf.mxu0
        %621 = vmatprep.mubr.bf16.mxu0 0
        %622 = vmatmul.mubr.bf16.gmra.mxu0 %v514
        %v623 = vpop.f32.mrf.mxu0
        %v624 = vadd.f32 0.0, %v623
        %v625 = vpop.f32.mrf.mxu0
        %v626 = vpop.f32.mrf.mxu0
        %v627 = vadd.f32 0.0, %v626
        %v628 = vpop.f32.mrf.mxu0
        %629 = vmatprep.mubr.bf16.mxu0 0
        %630 = vmatmul.mubr.bf16.gmra.mxu0 %v515
        %v631 = vpop.f32.mrf.mxu0
        %v632 = vadd.f32 0.0, %v631
        %v633 = vpop.f32.mrf.mxu0
        %v634 = vpop.f32.mrf.mxu0
        %v635 = vadd.f32 0.0, %v634
        %v636 = vpop.f32.mrf.mxu0
        %637 = vmatprep.mubr.bf16.mxu0 0
        %638 = vmatmul.mubr.bf16.gmra.mxu0 %v516
        %v639 = vpop.f32.mrf.mxu0
        %v640 = vadd.f32 0.0, %v639
        %v641 = vpop.f32.mrf.mxu0
        %v642 = vpop.f32.mrf.mxu0
        %v643 = vadd.f32 0.0, %v642
        %v644 = vpop.f32.mrf.mxu0
        %645 = vdwg.mxu0
        %v646 = vadd.f32 %v505, %v616
        %v647 = vadd.f32 %v506, %v619
        %v648 = vadd.f32 %v507, %v624
        %v649 = vadd.f32 %v508, %v627
        %v650 = vadd.f32 %v509, %v632
        %v651 = vadd.f32 %v510, %v635
        %v652 = vadd.f32 %v511, %v640
        %v653 = vadd.f32 %v512, %v643
        %654 = vst [vmem:[#allocation2] sm:$0xff] %v646
        %655 = vst [vmem:[#allocation2 + $0x8] sm:$0xff] %v647
        %656 = vst [vmem:[#allocation2 + $0x10] sm:$0xff] %v648
        %657 = vst [vmem:[#allocation2 + $0x18] sm:$0xff] %v649
        %658 = vst [vmem:[#allocation2 + $0x20] sm:$0xff] %v650
        %659 = vst [vmem:[#allocation2 + $0x28] sm:$0xff] %v651
        %660 = vst [vmem:[#allocation2 + $0x30] sm:$0xff] %v652
        %661 = vst [vmem:[#allocation2 + $0x38] sm:$0xff] %v653
        // Predicated region
        $region45: #{tpu_custom_call.1} parent=39 // pred_check
          %p662 = pneg %p292
        $region46: #{tpu_custom_call.1} parent=39 // pred_check_branch
          %664 = sbr.rel (%p662) target = $region48
        $region47: #{tpu_custom_call.1} parent=39 // pred_region
          %v665 = vld [vmem:[#allocation2] sm:$0xff]
          %v666 = vld [vmem:[#allocation2 + $0x8] sm:$0xff]
          %v667 = vld [vmem:[#allocation2 + $0x10] sm:$0xff]
          %v668 = vld [vmem:[#allocation2 + $0x18] sm:$0xff]
          %v669 = vld [vmem:[#allocation2 + $0x20] sm:$0xff]
          %v670 = vld [vmem:[#allocation2 + $0x28] sm:$0xff]
          %v671 = vld [vmem:[#allocation2 + $0x30] sm:$0xff]
          %v672 = vld [vmem:[#allocation2 + $0x38] sm:$0xff]
          %v673 = vld [vmem:[%s4] sm:$0x1]
          %v675 = vlaneseq
          %v676 = vshrl.u32 %v675, 7
          %v677 = vsub.s32 0, %v676
          %v678 = vrot.slane %v673, %v677
          %v680 = vadd.f32 %v665, %v678
          %v681 = vadd.f32 %v666, %v678
          %v682 = vadd.f32 %v667, %v678
          %v683 = vadd.f32 %v668, %v678
          %v684 = vadd.f32 %v669, %v678
          %v685 = vadd.f32 %v670, %v678
          %v686 = vadd.f32 %v671, %v678
          %v687 = vadd.f32 %v672, %v678
          %688 = vst [vmem:[%s270] sm:$0xff] %v680
          %689 = vst [vmem:[%s270 + $0x8] sm:$0xff] %v681
          %690 = vst [vmem:[%s270 + $0x10] sm:$0xff] %v682
          %691 = vst [vmem:[%s270 + $0x18] sm:$0xff] %v683
          %692 = vst [vmem:[%s270 + $0x20] sm:$0xff] %v684
          %693 = vst [vmem:[%s270 + $0x28] sm:$0xff] %v685
          %694 = vst [vmem:[%s270 + $0x30] sm:$0xff] %v686
          %695 = vst [vmem:[%s270 + $0x38] sm:$0xff] %v687
        $region48: #{tpu_custom_call.1} parent=39 // pred_fallthru
          _
        %s696 = sand.u32 %s164, 1
        %s697 = scalar_lea.sflag [#allocation4], %s696
        %s698 = sand.u32 %s164, 1
        %s699 = smul.addr %s698, 64
        %s700 = scalar_lea.vmem [#allocation3], %s699
        // Predicated region
        $region49: #{tpu_custom_call.1} parent=39 // pred_check
          %p701 = pneg %p174
        $region50: #{tpu_custom_call.1} parent=39 // pred_check_branch
          %703 = sbr.rel (%p701) target = $region52
        $region51: #{tpu_custom_call.1} parent=39 // pred_region
          %s704 = smul.u32 8, %s23
          %s706 = ssub.s32 1024, 1024
          %707 = vsyncadd %s697, %s706
          %s708 = smul.addr %s704, 128
          %s709 = scalar_lea.hbm %s5, %s708
          %s710 = sshll.u32 %s700, 4
          %s711 = int_to_ptr.vmem [resolvable:$true] %s710
          %716 = dma.vmem_to_hbm [thread:$0]  %s711, 1024, %s709, %s697, 128, 128, 8
        $region52: #{tpu_custom_call.1} parent=39 // pred_fallthru
          _
      $region40: #{tpu_custom_call.1} parent=5 // pred_fallthru
        _
      %p717 = scmp.le.s32.totalorder 2, %s14
      // Predicated region
      $region53: #{tpu_custom_call.1} parent=5 // pred_check
        %p718 = pneg %p717
      $region54: #{tpu_custom_call.1} parent=5 // pred_check_branch
        %720 = sbr.rel (%p718) target = $region56
      $region55: #{tpu_custom_call.1} parent=5 // pred_region
        %s721 = ssub.s32 %s14, 2
        // Predicated region
        $region57: #{tpu_custom_call.1} parent=55 // pred_check
          %p722 = pneg %p180
        $region58: #{tpu_custom_call.1} parent=55 // pred_check_branch
          %724 = sbr.rel (%p722) target = $region60
        $region59: #{tpu_custom_call.1} parent=55 // pred_region
          %s725 = sand.u32 %s165, 1
          %s726 = scalar_lea.sflag [#allocation4], %s725
          %s727 = sand.u32 %s165, 1
          %s728 = smul.addr %s727, 64
          %s729 = scalar_lea.vmem [#allocation3], %s728
          %730 = dma.done %s726, 1024
        $region60: #{tpu_custom_call.1} parent=55 // pred_fallthru
          _
      $region56: #{tpu_custom_call.1} parent=5 // pred_fallthru
        _
    $region6: #{tpu_custom_call.1} parent=1 // loop_footer
      %s18 = sadd.s32 1, %s14
    $region7: #{tpu_custom_call.1} parent=1 // loop_footer_branch
      %13 = sbr.rel target = $region3
    $region8: #{tpu_custom_call.1} parent=1 // loop_exit
      _
    %731 = vsyncpa [#allocation4], 1
    %s732 = scalar_lea.sflag [#allocation4], 1
    %733 = vsyncpa %s732, 1

// kernel: tpu_custom_call.1
$region0: #{tpu_custom_call.1}
  #allocation0 [shape = 'u32[]', space=smem, size = 0x4, offset = 0x4, fixed_abs, tag = 'smem constant byte address 0x4 - core index']
  #allocation1 [shape = 'u32[144,128]{1,0:T(1,128)}', space=vmem, size = 0x12000, scoped, tag = 'internal scratch']
  #allocation2 [shape = 'f32[64,128]{1,0:T(8,128)}', space=vmem, size = 0x8000, scoped, tag = 'scratch operand']
  %s0 = inlined_call_operand.vmem [shape: bf16[128,32], index: 0, kind: input, shape index: {}]
  %s1 = inlined_call_operand.vmem [shape: bf16[32,128], index: 1, kind: input, shape index: {}]
  %s2 = inlined_call_operand.vmem [shape: f32[1,128], index: 2, kind: input, shape index: {}]
  %s3 = inlined_call_operand.vmem [shape: bf16[128,128], index: 3, kind: input, shape index: {}]
  %s4 = inlined_call_operand.vmem [shape: f32[1,128], index: 4, kind: input, shape index: {}]
  %s5 = inlined_call_operand.hbm [shape: f32[128,128], index: 5, kind: output, shape index: {}]
  %s6 = sld [smem:[#allocation0]]
  $region61: #{tpu_custom_call.1} parent=0
    _
  %s8 = ssub.s32 1, %s6
  %s9 = scalar_select 0, %s8, %s6
  $region1: #{tpu_custom_call.1} parent=0
    #allocation3 [shape = 'u8[65536]{0}', space=vmem, size = 0x10000, scoped, tag = 'output window, operand 0']
    #allocation4 [shape = 's32[2]{0}', space=sflag, size = 0x8, scoped, tag = 'scoped memory for tpu_custom_call.1']
    %10 = vsyncpa [#allocation4], 0
    %s11 = scalar_lea.sflag [#allocation4], 1
    %12 = vsyncpa %s11, 0
    loop: start=0, step=1, limit=4
    $region2: #{tpu_custom_call.1} parent=1 // loop_pre_header
      _
    $region3: #{tpu_custom_call.1} parent=1 // loop_header
      %s14 = sphi 0, %s18
      %p15 = scmp.ge.s32.totalorder %s14, 4
      %s21 = sphi 0, %s33
      %s22 = sphi 0, %s29
      %s23 = sphi 0, %s21
      %s24 = sphi 0, %s22
      %s25 = sphi 0, %s23
      %s26 = sphi 0, %s24
      %s36 = sphi 0, %s38
      %s39 = sphi 0, %s36
      %s40 = sphi 0, %s39
      %s56 = sphi 0, %s40
      %s62 = sphi 0, %s64
      %s65 = sphi 0, %s62
      %s66 = sphi 0, %s65
      %s82 = sphi 0, %s66
      %s88 = sphi 0, %s90
      %s91 = sphi 0, %s88
      %s92 = sphi 0, %s91
      %s108 = sphi 0, %s92
      %s114 = sphi 0, %s116
      %s117 = sphi 0, %s114
      %s118 = sphi 0, %s117
      %s134 = sphi 0, %s118
      %s138 = sphi 0, %s138
      %s140 = sphi 0, %s138
      %s141 = sphi 0, %s140
      %s155 = sphi 0, %s141
      %s161 = sphi 0, %s163
      %s164 = sphi 0, %s161
      %s165 = sphi 0, %s164
      %s181 = sphi 0, %s165
    $region4: #{tpu_custom_call.1} parent=1 // loop_header_branch
      %17 = sbr.rel (%p15) target = $region8
    $region5: #{tpu_custom_call.1} parent=1 // loop_body
      %s19 = ssub.s32 %s14, 1
      %s20 = ssub.s32 %s14, 2
      %s27 = sadd.s32 1, %s22
      %p28 = scmp.ge.s32.totalorder %s27, 1
      %s29 = scalar_select %p28, 0, %s27
      %s30 = sadd.s32 1, %s21
      %s31 = scalar_select %p28, %s30, %s21
      %p32 = scmp.ge.s32.totalorder %s31, 2
      %s33 = scalar_select %p32, 0, %s31
      %s34 = ssub.s32 %s21, %s33
      %p35 = scmp.eq.s32.totalorder %s34, 0
      %s37 = sadd.s32 %s36, 1
      %s38 = scalar_select %p35, %s36, %s37
      %p41 = pneg %p35
      %p42 = scmp.eq.s32.totalorder %s14, 1
      %p43 = por %p41, %p42
      %p44 = scmp.ne.s32.totalorder %s36, %s39
      %p45 = scmp.eq.s32.totalorder %s14, 0
      %p46 = por %p44, %p45
      %p47 = scmp.ne.s32.totalorder %s36, %s39
      %p48 = scmp.eq.s32.totalorder %s19, 1
      %p49 = por %p47, %p48
      %p50 = scmp.ne.s32.totalorder %s39, %s40
      %p51 = scmp.eq.s32.totalorder %s19, 0
      %p52 = por %p50, %p51
      %p53 = scmp.ne.s32.totalorder %s39, %s40
      %p54 = scmp.eq.s32.totalorder %s20, 1
      %p55 = por %p53, %p54
      %p57 = scmp.ne.s32.totalorder %s40, %s56
      %p58 = scmp.eq.s32.totalorder %s20, 0
      %p59 = por %p57, %p58
      %s60 = ssub.s32 %s22, %s29
      %p61 = scmp.eq.s32.totalorder %s60, 0
      %s63 = sadd.s32 %s62, 1
      %s64 = scalar_select %p61, %s62, %s63
      %p67 = pneg %p61
      %p68 = scmp.eq.s32.totalorder %s14, 1
      %p69 = por %p67, %p68
      %p70 = scmp.ne.s32.totalorder %s62, %s65
      %p71 = scmp.eq.s32.totalorder %s14, 0
      %p72 = por %p70, %p71
      %p73 = scmp.ne.s32.totalorder %s62, %s65
      %p74 = scmp.eq.s32.totalorder %s19, 1
      %p75 = por %p73, %p74
      %p76 = scmp.ne.s32.totalorder %s65, %s66
      %p77 = scmp.eq.s32.totalorder %s19, 0
      %p78 = por %p76, %p77
      %p79 = scmp.ne.s32.totalorder %s65, %s66
      %p80 = scmp.eq.s32.totalorder %s20, 1
      %p81 = por %p79, %p80
      %p83 = scmp.ne.s32.totalorder %s66, %s82
      %p84 = scmp.eq.s32.totalorder %s20, 0
      %p85 = por %p83, %p84
      %s86 = ssub.s32 %s22, %s29
      %p87 = scmp.eq.s32.totalorder %s86, 0
      %s89 = sadd.s32 %s88, 1
      %s90 = scalar_select %p87, %s88, %s89
      %p93 = pneg %p87
      %p94 = scmp.eq.s32.totalorder %s14, 1
      %p95 = por %p93, %p94
      %p96 = scmp.ne.s32.totalorder %s88, %s91
      %p97 = scmp.eq.s32.totalorder %s14, 0
      %p98 = por %p96, %p97
      %p99 = scmp.ne.s32.totalorder %s88, %s91
      %p100 = scmp.eq.s32.totalorder %s19, 1
      %p101 = por %p99, %p100
      %p102 = scmp.ne.s32.totalorder %s91, %s92
      %p103 = scmp.eq.s32.totalorder %s19, 0
      %p104 = por %p102, %p103
      %p105 = scmp.ne.s32.totalorder %s91, %s92
      %p106 = scmp.eq.s32.totalorder %s20, 1
      %p107 = por %p105, %p106
      %p109 = scmp.ne.s32.totalorder %s92, %s108
      %p110 = scmp.eq.s32.totalorder %s20, 0
      %p111 = por %p109, %p110
      %s112 = ssub.s32 %s22, %s29
      %p113 = scmp.eq.s32.totalorder %s112, 0
      %s115 = sadd.s32 %s114, 1
      %s116 = scalar_select %p113, %s114, %s115
      %p119 = pneg %p113
      %p120 = scmp.eq.s32.totalorder %s14, 1
      %p121 = por %p119, %p120
      %p122 = scmp.ne.s32.totalorder %s114, %s117
      %p123 = scmp.eq.s32.totalorder %s14, 0
      %p124 = por %p122, %p123
      %p125 = scmp.ne.s32.totalorder %s114, %s117
      %p126 = scmp.eq.s32.totalorder %s19, 1
      %p127 = por %p125, %p126
      %p128 = scmp.ne.s32.totalorder %s117, %s118
      %p129 = scmp.eq.s32.totalorder %s19, 0
      %p130 = por %p128, %p129
      %p131 = scmp.ne.s32.totalorder %s117, %s118
      %p132 = scmp.eq.s32.totalorder %s20, 1
      %p133 = por %p131, %p132
      %p135 = scmp.ne.s32.totalorder %s118, %s134
      %p136 = scmp.eq.s32.totalorder %s20, 0
      %p137 = por %p135, %p136
      %s139 = sadd.s32 %s138, 1
      %p142 = scmp.eq.s32.totalorder %s14, 1
      %p143 = scmp.ne.s32.totalorder %s138, %s140
      %p144 = scmp.eq.s32.totalorder %s14, 0
      %p145 = por %p143, %p144
      %p146 = scmp.ne.s32.totalorder %s138, %s140
      %p147 = scmp.eq.s32.totalorder %s19, 1
      %p148 = por %p146, %p147
      %p149 = scmp.ne.s32.totalorder %s140, %s141
      %p150 = scmp.eq.s32.totalorder %s19, 0
      %p151 = por %p149, %p150
      %p152 = scmp.ne.s32.totalorder %s140, %s141
      %p153 = scmp.eq.s32.totalorder %s20, 1
      %p154 = por %p152, %p153
      %p156 = scmp.ne.s32.totalorder %s141, %s155
      %p157 = scmp.eq.s32.totalorder %s20, 0
      %p158 = por %p156, %p157
      %s159 = ssub.s32 %s21, %s33
      %p160 = scmp.eq.s32.totalorder %s159, 0
      %s162 = sadd.s32 %s161, 1
      %s163 = scalar_select %p160, %s161, %s162
      %p166 = pneg %p160
      %p167 = scmp.eq.s32.totalorder %s14, 1
      %p168 = por %p166, %p167
      %p169 = scmp.ne.s32.totalorder %s161, %s164
      %p170 = scmp.eq.s32.totalorder %s14, 0
      %p171 = por %p169, %p170
      %p172 = scmp.ne.s32.totalorder %s161, %s164
      %p173 = scmp.eq.s32.totalorder %s19, 1
      %p174 = por %p172, %p173
      %p175 = scmp.ne.s32.totalorder %s164, %s165
      %p176 = scmp.eq.s32.totalorder %s19, 0
      %p177 = por %p175, %p176
      %p178 = scmp.ne.s32.totalorder %s164, %s165
      %p179 = scmp.eq.s32.totalorder %s20, 1
      %p180 = por %p178, %p179
      %p182 = scmp.ne.s32.totalorder %s165, %s181
      %p183 = scmp.eq.s32.totalorder %s20, 0
      %p184 = por %p182, %p183
      %p185 = scmp.le.s32.totalorder 1, %s14
      %p186 = scmp.lt.s32.totalorder %s14, 3
      %p187 = pnand %p185, %p186
      %p188 = pneg %p187
      // Predicated region
      $region9: #{tpu_custom_call.1} parent=5 // pred_check
        _
      $region10: #{tpu_custom_call.1} parent=5 // pred_check_branch
        %190 = sbr.rel (%p187) target = $region12
      $region11: #{tpu_custom_call.1} parent=5 // pred_region
        %s191 = ssub.s32 %s14, 1
        // Predicated region
        $region13: #{tpu_custom_call.1} parent=11 // pred_check
          %p192 = pneg %p78
        $region14: #{tpu_custom_call.1} parent=11 // pred_check_branch
          %194 = sbr.rel (%p192) target = $region16
        $region15: #{tpu_custom_call.1} parent=11 // pred_region
          %p195 = scmp.lt.s32.totalorder %s24, 0
          %s196 = scalar_select %p195, %s24, 0
          %s197 = smul.addr %s196, 4
          %s198 = scalar_lea.vmem %s1, %s197
        $region16: #{tpu_custom_call.1} parent=11 // pred_fallthru
          _
        // Predicated region
        $region17: #{tpu_custom_call.1} parent=11 // pred_check
          %p199 = pneg %p104
        $region18: #{tpu_custom_call.1} parent=11 // pred_check_branch
          %201 = sbr.rel (%p199) target = $region20
        $region19: #{tpu_custom_call.1} parent=11 // pred_region
          %p202 = scmp.lt.s32.totalorder %s24, 0
          %s203 = scalar_select %p202, %s24, 0
          %s204 = scalar_lea.vmem %s2, %s203
        $region20: #{tpu_custom_call.1} parent=11 // pred_fallthru
          _
        // Predicated region
        $region21: #{tpu_custom_call.1} parent=11 // pred_check
          %p205 = pneg %p130
        $region22: #{tpu_custom_call.1} parent=11 // pred_check_branch
          %207 = sbr.rel (%p205) target = $region24
        $region23: #{tpu_custom_call.1} parent=11 // pred_region
          %s208 = smul.u32 16, %s24
          %p209 = scmp.lt.s32.totalorder %s208, 15
          %s210 = scalar_select %p209, %s208, 15
          %s211 = smul.addr %s210, 4
          %s212 = scalar_lea.vmem %s3, %s211
          %s213 = smul.u32 16, %s24
        $region24: #{tpu_custom_call.1} parent=11 // pred_fallthru
          _
        // Predicated region
        $region25: #{tpu_custom_call.1} parent=11 // pred_check
          %p214 = pneg %p151
        $region26: #{tpu_custom_call.1} parent=11 // pred_check_branch
          %216 = sbr.rel (%p214) target = $region28
        $region27: #{tpu_custom_call.1} parent=11 // pred_region
          _
        $region28: #{tpu_custom_call.1} parent=11 // pred_fallthru
          _
      $region12: #{tpu_custom_call.1} parent=5 // pred_fallthru
        _
      %p217 = scmp.lt.s32.totalorder %s14, 2
      // Predicated region
      $region29: #{tpu_custom_call.1} parent=5 // pred_check
        %p218 = pneg %p217
      $region30: #{tpu_custom_call.1} parent=5 // pred_check_branch
        %220 = sbr.rel (%p218) target = $region32
      $region31: #{tpu_custom_call.1} parent=5 // pred_region
        // Predicated region
        $region33: #{tpu_custom_call.1} parent=31 // pred_check
          %p221 = pneg %p46
        $region34: #{tpu_custom_call.1} parent=31 // pred_check_branch
          %223 = sbr.rel (%p221) target = $region36
        $region35: #{tpu_custom_call.1} parent=31 // pred_region
          %s224 = smul.u32 8, %s21
          %p225 = scmp.lt.s32.totalorder %s224, 15
          %s226 = scalar_select %p225, %s224, 15
          %s227 = smul.addr %s226, 4
          %s228 = scalar_lea.vmem %s0, %s227
          %s229 = smul.u32 8, %s21
        $region36: #{tpu_custom_call.1} parent=31 // pred_fallthru
          _
      $region32: #{tpu_custom_call.1} parent=5 // pred_fallthru
        _
      %p230 = scmp.le.s32.totalorder 1, %s14
      %p231 = scmp.lt.s32.totalorder %s14, 3
      %p232 = pnand %p230, %p231
      %p233 = pneg %p232
      // Predicated region
      $region37: #{tpu_custom_call.1} parent=5 // pred_check
        _
      $region38: #{tpu_custom_call.1} parent=5 // pred_check_branch
        %235 = sbr.rel (%p232) target = $region40
      $region39: #{tpu_custom_call.1} parent=5 // pred_region
        %s236 = ssub.s32 %s14, 1
        %s237 = smul.u32 8, %s23
        %p238 = scmp.lt.s32.totalorder %s237, 15
        %s239 = scalar_select %p238, %s237, 15
        %s240 = smul.addr %s239, 4
        %s241 = scalar_lea.vmem %s0, %s240
        %p242 = pneg %p52
        %p243 = pneg %p49
        %p244 = scmp.lt.s32.totalorder %s24, 0
        %s245 = scalar_select %p244, %s24, 0
        %s246 = smul.addr %s245, 4
        %s247 = scalar_lea.vmem %s1, %s246
        %p248 = pneg %p78
        %p249 = pneg %p75
        %p250 = scmp.lt.s32.totalorder %s24, 0
        %s251 = scalar_select %p250, %s24, 0
        %s252 = scalar_lea.vmem %s2, %s251
        %p253 = pneg %p104
        %p254 = pneg %p101
        %s255 = smul.u32 16, %s24
        %p256 = scmp.lt.s32.totalorder %s255, 15
        %s257 = scalar_select %p256, %s255, 15
        %s258 = smul.addr %s257, 4
        %s259 = scalar_lea.vmem %s3, %s258
        %p260 = pneg %p130
        %p261 = pneg %p127
        %p262 = pneg %p151
        %p263 = pneg %p148
        %p264 = pneg %p177
        %p265 = pneg %p174
        %s266 = sand.u32 %s164, 1
        %s267 = scalar_lea.sflag [#allocation4], %s266
        %s268 = sand.u32 %s164, 1
        %s269 = smul.addr %s268, 64
        %s270 = scalar_lea.vmem [#allocation3], %s269
        %s271 = smul.u32 8, %s23
        %p272 = scmp.lt.s32.totalorder %s271, 15
        %s273 = scalar_select %p272, %s271, 15
        %s274 = smul.addr %s273, 4
        %s275 = scalar_lea.vmem %s0, %s274
        %s276 = smul.u32 8, %s23
        %p277 = scmp.lt.s32.totalorder %s24, 0
        %s278 = scalar_select %p277, %s24, 0
        %s279 = smul.addr %s278, 4
        %s280 = scalar_lea.vmem %s1, %s279
        %p281 = scmp.lt.s32.totalorder %s24, 0
        %s282 = scalar_select %p281, %s24, 0
        %s283 = scalar_lea.vmem %s2, %s282
        %s284 = smul.u32 16, %s24
        %p285 = scmp.lt.s32.totalorder %s284, 15
        %s286 = scalar_select %p285, %s284, 15
        %s287 = smul.addr %s286, 4
        %s288 = scalar_lea.vmem %s3, %s287
        %s289 = smul.u32 16, %s24
        %s290 = smul.u32 8, %s23
        %p292 = scmp.eq.s32.totalorder %s24, 0
        // Predicated region
        $region41: #{tpu_custom_call.1} parent=39 // pred_check
          %p293 = pneg %p292
        $region42: #{tpu_custom_call.1} parent=39 // pred_check_branch
          %295 = sbr.rel (%p293) target = $region44
        $region43: #{tpu_custom_call.1} parent=39 // pred_region
          %296 = vst [vmem:[#allocation2] sm:$0xff] 0.0
          %297 = vst [vmem:[#allocation2 + $0x8] sm:$0xff] 0.0
          %298 = vst [vmem:[#allocation2 + $0x10] sm:$0xff] 0.0
          %299 = vst [vmem:[#allocation2 + $0x18] sm:$0xff] 0.0
          %300 = vst [vmem:[#allocation2 + $0x20] sm:$0xff] 0.0
          %301 = vst [vmem:[#allocation2 + $0x28] sm:$0xff] 0.0
          %302 = vst [vmem:[#allocation2 + $0x30] sm:$0xff] 0.0
          %303 = vst [vmem:[#allocation2 + $0x38] sm:$0xff] 0.0
        $region44: #{tpu_custom_call.1} parent=39 // pred_fallthru
          _
        %v304 = vld [vmem:[%s275] sm:$0xf]
        %v305 = vld [vmem:[%s275 + $0x4] sm:$0xf]
        %v306 = vld [vmem:[%s275 + $0x8] sm:$0xf]
        %v307 = vld [vmem:[%s275 + $0xc] sm:$0xf]
        %v308 = vld [vmem:[%s275 + $0x10] sm:$0xf]
        %v309 = vld [vmem:[%s275 + $0x14] sm:$0xf]
        %v310 = vld [vmem:[%s275 + $0x18] sm:$0xf]
        %v311 = vld [vmem:[%s275 + $0x1c] sm:$0xf]
        %v312 = vld [vmem:[%s280] sm:$0xf]
        %v313 = vld [vmem:[%s280 + $0x4] sm:$0xf]
        %v314 = vld [vmem:[%s280 + $0x8] sm:$0xf]
        %v315 = vld [vmem:[%s280 + $0xc] sm:$0xf]
        %v316 = vld [vmem:[%s283] sm:$0x1]
        %v318 = vlaneseq
        %v319 = vshrl.u32 %v318, 7
        %v320 = vsub.s32 0, %v319
        %v321 = vrot.slane %v316, %v320
        %v331 = vunpack.c.l.b16 %v304
        %v332 = vunpack.c.l.b16 %v305
        %v333 = vunpack.c.l.b16 %v306
        %v334 = vunpack.c.l.b16 %v307
        %v335 = vunpack.c.l.b16 %v308
        %v336 = vunpack.c.l.b16 %v309
        %v337 = vunpack.c.l.b16 %v310
        %v338 = vunpack.c.l.b16 %v311
        %v339 = vpack.c.b16 %v332, %v331
        %v340 = vpack.c.b16 %v334, %v333
        %v341 = vpack.c.b16 %v336, %v335
        %v342 = vpack.c.b16 %v338, %v337
        %v347 = vunpack.c.l.b16 %v312
        %v348 = vunpack.c.l.b16 %v313
        %v349 = vunpack.c.l.b16 %v314
        %v350 = vunpack.c.l.b16 %v315
        %v351 = vpack.c.b16 %v348, %v347
        %v352 = vpack.c.b16 %v350, %v349
        %vm355 = vcmask 261120
        %v357 = vsel %vm355, %v339, 0
        %v360 = vsel %vm355, %v340, 0
        %v363 = vsel %vm355, %v341, 0
        %v366 = vsel %vm355, %v342, 0
        %368 = vmatprep.subr.bf16.mxu0 0
        %369 = vmatpush1.bf16.msra.mxu0 0
        %370 = vmatprep.subr.bf16.mxu0 0
        %371 = vmatpush1.bf16.msra.mxu0 0
        %372 = vmatprep.subr.bf16.mxu0 0
        %373 = vmatpush1.bf16.msra.mxu0 0
        %374 = vmatprep.subr.bf16.mxu0 0
        %375 = vmatpush1.bf16.msra.mxu0 0
        %376 = vmatprep.subr.bf16.mxu0 0
        %377 = vmatpush1.bf16.msra.mxu0 0
        %378 = vmatprep.subr.bf16.mxu0 0
        %379 = vmatpush1.bf16.msra.mxu0 0
        %380 = vmatprep.subr.bf16.mxu0 0
        %381 = vmatpush1.bf16.msra.mxu0 %v352
        %382 = vmatprep.subr.bf16.mxu0 0
        %383 = vmatpush1.bf16.msra.mxu0 %v351
        %384 = vmatprep.subr.bf16.mxu0 0
        %385 = vmatpush2.bf16.msra.mxu0 0
        %386 = vmatprep.subr.bf16.mxu0 0
        %387 = vmatpush2.bf16.msra.mxu0 0
        %388 = vmatprep.subr.bf16.mxu0 0
        %389 = vmatpush2.bf16.msra.mxu0 0
        %390 = vmatprep.subr.bf16.mxu0 0
        %391 = vmatpush2.bf16.msra.mxu0 0
        %392 = vmatprep.subr.bf16.mxu0 0
        %393 = vmatpush2.bf16.msra.mxu0 0
        %394 = vmatprep.subr.bf16.mxu0 0
        %395 = vmatpush2.bf16.msra.mxu0 0
        %396 = vmatprep.subr.bf16.mxu0 0
        %397 = vmatpush2.bf16.msra.mxu0 0
        %398 = vmatprep.subr.bf16.mxu0 0
        %399 = vmatpush2.bf16.msra.mxu0 0
        %400 = vmatprep.mubr.bf16.mxu0 0
        %401 = vmatmul.mubr.bf16.gmra.mxu0 %v357
        %v402 = vpop.f32.mrf.mxu0
        %v403 = vadd.f32 %v321, %v402
        %v404 = vpop.f32.mrf.mxu0
        %v405 = vpop.f32.mrf.mxu0
        %v406 = vadd.f32 %v321, %v405
        %v407 = vpop.f32.mrf.mxu0
        %408 = vmatprep.mubr.bf16.mxu0 0
        %409 = vmatmul.mubr.bf16.gmra.mxu0 %v360
        %v410 = vpop.f32.mrf.mxu0
        %v411 = vadd.f32 %v321, %v410
        %v412 = vpop.f32.mrf.mxu0
        %v413 = vpop.f32.mrf.mxu0
        %v414 = vadd.f32 %v321, %v413
        %v415 = vpop.f32.mrf.mxu0
        %416 = vmatprep.mubr.bf16.mxu0 0
        %417 = vmatmul.mubr.bf16.gmra.mxu0 %v363
        %v418 = vpop.f32.mrf.mxu0
        %v419 = vadd.f32 %v321, %v418
        %v420 = vpop.f32.mrf.mxu0
        %v421 = vpop.f32.mrf.mxu0
        %v422 = vadd.f32 %v321, %v421
        %v423 = vpop.f32.mrf.mxu0
        %424 = vmatprep.mubr.bf16.mxu0 0
        %425 = vmatmul.mubr.bf16.gmra.mxu0 %v366
        %v426 = vpop.f32.mrf.mxu0
        %v427 = vadd.f32 %v321, %v426
        %v428 = vpop.f32.mrf.mxu0
        %v429 = vpop.f32.mrf.mxu0
        %v430 = vadd.f32 %v321, %v429
        %v431 = vpop.f32.mrf.mxu0
        %432 = vdwg.mxu0
        %v433 = vmul.f32 %v403, 0.5
        %v434 = vmul.f32 %v406, 0.5
        %v435 = vmul.f32 %v411, 0.5
        %v436 = vmul.f32 %v414, 0.5
        %v437 = vmul.f32 %v419, 0.5
        %v438 = vmul.f32 %v422, 0.5
        %v439 = vmul.f32 %v427, 0.5
        %v440 = vmul.f32 %v430, 0.5
        %v441 = vmul.f32 %v403, %v403
        %v442 = vmul.f32 %v406, %v406
        %v443 = vmul.f32 %v411, %v411
        %v444 = vmul.f32 %v414, %v414
        %v445 = vmul.f32 %v419, %v419
        %v446 = vmul.f32 %v422, %v422
        %v447 = vmul.f32 %v427, %v427
        %v448 = vmul.f32 %v430, %v430
        %v449 = vmul.f32 %v441, %v403
        %v450 = vmul.f32 %v442, %v406
        %v451 = vmul.f32 %v443, %v411
        %v452 = vmul.f32 %v444, %v414
        %v453 = vmul.f32 %v445, %v419
        %v454 = vmul.f32 %v446, %v422
        %v455 = vmul.f32 %v447, %v427
        %v456 = vmul.f32 %v448, %v430
        %v457 = vmul.f32 %v449, 0.044715
        %v458 = vmul.f32 %v450, 0.044715
        %v459 = vmul.f32 %v451, 0.044715
        %v460 = vmul.f32 %v452, 0.044715
        %v461 = vmul.f32 %v453, 0.044715
        %v462 = vmul.f32 %v454, 0.044715
        %v463 = vmul.f32 %v455, 0.044715
        %v464 = vmul.f32 %v456, 0.044715
        %v465 = vadd.f32 %v403, %v457
        %v466 = vadd.f32 %v406, %v458
        %v467 = vadd.f32 %v411, %v459
        %v468 = vadd.f32 %v414, %v460
        %v469 = vadd.f32 %v419, %v461
        %v470 = vadd.f32 %v422, %v462
        %v471 = vadd.f32 %v427, %v463
        %v472 = vadd.f32 %v430, %v464
        %v473 = vmul.f32 %v465, 0.7978846
        %v474 = vmul.f32 %v466, 0.7978846
        %v475 = vmul.f32 %v467, 0.7978846
        %v476 = vmul.f32 %v468, 0.7978846
        %v477 = vmul.f32 %v469, 0.7978846
        %v478 = vmul.f32 %v470, 0.7978846
        %v479 = vmul.f32 %v471, 0.7978846
        %v480 = vmul.f32 %v472, 0.7978846
        %v481 = vtanh.pop %v473
        %v482 = vtanh.pop %v474
        %v483 = vtanh.pop %v475
        %v484 = vtanh.pop %v476
        %v485 = vtanh.pop %v477
        %v486 = vtanh.pop %v478
        %v487 = vtanh.pop %v479
        %v488 = vtanh.pop %v480
        %v489 = vadd.f32 %v481, 1.0
        %v490 = vadd.f32 %v482, 1.0
        %v491 = vadd.f32 %v483, 1.0
        %v492 = vadd.f32 %v484, 1.0
        %v493 = vadd.f32 %v485, 1.0
        %v494 = vadd.f32 %v486, 1.0
        %v495 = vadd.f32 %v487, 1.0
        %v496 = vadd.f32 %v488, 1.0
        %v497 = vmul.f32 %v433, %v489
        %v498 = vmul.f32 %v434, %v490
        %v499 = vmul.f32 %v435, %v491
        %v500 = vmul.f32 %v436, %v492
        %v501 = vmul.f32 %v437, %v493
        %v502 = vmul.f32 %v438, %v494
        %v503 = vmul.f32 %v439, %v495
        %v504 = vmul.f32 %v440, %v496
        %v505 = vld [vmem:[#allocation2] sm:$0xff]
        %v506 = vld [vmem:[#allocation2 + $0x8] sm:$0xff]
        %v507 = vld [vmem:[#allocation2 + $0x10] sm:$0xff]
        %v508 = vld [vmem:[#allocation2 + $0x18] sm:$0xff]
        %v509 = vld [vmem:[#allocation2 + $0x20] sm:$0xff]
        %v510 = vld [vmem:[#allocation2 + $0x28] sm:$0xff]
        %v511 = vld [vmem:[#allocation2 + $0x30] sm:$0xff]
        %v512 = vld [vmem:[#allocation2 + $0x38] sm:$0xff]
        %v513 = vpack.c.bf16 %v498, %v497
        %v514 = vpack.c.bf16 %v500, %v499
        %v515 = vpack.c.bf16 %v502, %v501
        %v516 = vpack.c.bf16 %v504, %v503
        %v517 = vld [vmem:[%s288] sm:$0xf]
        %v518 = vld [vmem:[%s288 + $0x4] sm:$0xf]
        %v519 = vld [vmem:[%s288 + $0x8] sm:$0xf]
        %v520 = vld [vmem:[%s288 + $0xc] sm:$0xf]
        %v521 = vld [vmem:[%s288 + $0x10] sm:$0xf]
        %v522 = vld [vmem:[%s288 + $0x14] sm:$0xf]
        %v523 = vld [vmem:[%s288 + $0x18] sm:$0xf]
        %v524 = vld [vmem:[%s288 + $0x1c] sm:$0xf]
        %v525 = vld [vmem:[%s288 + $0x20] sm:$0xf]
        %v526 = vld [vmem:[%s288 + $0x24] sm:$0xf]
        %v527 = vld [vmem:[%s288 + $0x28] sm:$0xf]
        %v528 = vld [vmem:[%s288 + $0x2c] sm:$0xf]
        %v529 = vld [vmem:[%s288 + $0x30] sm:$0xf]
        %v530 = vld [vmem:[%s288 + $0x34] sm:$0xf]
        %v531 = vld [vmem:[%s288 + $0x38] sm:$0xf]
        %v532 = vld [vmem:[%s288 + $0x3c] sm:$0xf]
        %v549 = vunpack.c.l.b16 %v517
        %v550 = vunpack.c.l.b16 %v518
        %v551 = vunpack.c.l.b16 %v519
        %v552 = vunpack.c.l.b16 %v520
        %v553 = vunpack.c.l.b16 %v521
        %v554 = vunpack.c.l.b16 %v522
        %v555 = vunpack.c.l.b16 %v523
        %v556 = vunpack.c.l.b16 %v524
        %v557 = vunpack.c.l.b16 %v525
        %v558 = vunpack.c.l.b16 %v526
        %v559 = vunpack.c.l.b16 %v527
        %v560 = vunpack.c.l.b16 %v528
        %v561 = vunpack.c.l.b16 %v529
        %v562 = vunpack.c.l.b16 %v530
        %v563 = vunpack.c.l.b16 %v531
        %v564 = vunpack.c.l.b16 %v532
        %v565 = vpack.c.b16 %v550, %v549
        %v566 = vpack.c.b16 %v552, %v551
        %v567 = vpack.c.b16 %v554, %v553
        %v568 = vpack.c.b16 %v556, %v555
        %v569 = vpack.c.b16 %v558, %v557
        %v570 = vpack.c.b16 %v560, %v559
        %v571 = vpack.c.b16 %v562, %v561
        %v572 = vpack.c.b16 %v564, %v563
        %581 = vmatprep.subr.bf16.mxu0 0
        %582 = vmatpush1.bf16.msra.mxu0 %v572
        %583 = vmatprep.subr.bf16.mxu0 0
        %584 = vmatpush1.bf16.msra.mxu0 %v571
        %585 = vmatprep.subr.bf16.mxu0 0
        %586 = vmatpush1.bf16.msra.mxu0 %v570
        %587 = vmatprep.subr.bf16.mxu0 0
        %588 = vmatpush1.bf16.msra.mxu0 %v569
        %589 = vmatprep.subr.bf16.mxu0 0
        %590 = vmatpush1.bf16.msra.mxu0 %v568
        %591 = vmatprep.subr.bf16.mxu0 0
        %592 = vmatpush1.bf16.msra.mxu0 %v567
        %593 = vmatprep.subr.bf16.mxu0 0
        %594 = vmatpush1.bf16.msra.mxu0 %v566
        %595 = vmatprep.subr.bf16.mxu0 0
        %596 = vmatpush1.bf16.msra.mxu0 %v565
        %597 = vmatprep.subr.bf16.mxu0 0
        %598 = vmatpush2.bf16.msra.mxu0 0
        %599 = vmatprep.subr.bf16.mxu0 0
        %600 = vmatpush2.bf16.msra.mxu0 0
        %601 = vmatprep.subr.bf16.mxu0 0
        %602 = vmatpush2.bf16.msra.mxu0 0
        %603 = vmatprep.subr.bf16.mxu0 0
        %604 = vmatpush2.bf16.msra.mxu0 0
        %605 = vmatprep.subr.bf16.mxu0 0
        %606 = vmatpush2.bf16.msra.mxu0 0
        %607 = vmatprep.subr.bf16.mxu0 0
        %608 = vmatpush2.bf16.msra.mxu0 0
        %609 = vmatprep.subr.bf16.mxu0 0
        %610 = vmatpush2.bf16.msra.mxu0 0
        %611 = vmatprep.subr.bf16.mxu0 0
        %612 = vmatpush2.bf16.msra.mxu0 0
        %613 = vmatprep.mubr.bf16.mxu0 0
        %614 = vmatmul.mubr.bf16.gmra.mxu0 %v513
        %v615 = vpop.f32.mrf.mxu0
        %v616 = vadd.f32 0.0, %v615
        %v617 = vpop.f32.mrf.mxu0
        %v618 = vpop.f32.mrf.mxu0
        %v619 = vadd.f32 0.0, %v618
        %v620 = vpop.f32.mrf.mxu0
        %621 = vmatprep.mubr.bf16.mxu0 0
        %622 = vmatmul.mubr.bf16.gmra.mxu0 %v514
        %v623 = vpop.f32.mrf.mxu0
        %v624 = vadd.f32 0.0, %v623
        %v625 = vpop.f32.mrf.mxu0
        %v626 = vpop.f32.mrf.mxu0
        %v627 = vadd.f32 0.0, %v626
        %v628 = vpop.f32.mrf.mxu0
        %629 = vmatprep.mubr.bf16.mxu0 0
        %630 = vmatmul.mubr.bf16.gmra.mxu0 %v515
        %v631 = vpop.f32.mrf.mxu0
        %v632 = vadd.f32 0.0, %v631
        %v633 = vpop.f32.mrf.mxu0
        %v634 = vpop.f32.mrf.mxu0
        %v635 = vadd.f32 0.0, %v634
        %v636 = vpop.f32.mrf.mxu0
        %637 = vmatprep.mubr.bf16.mxu0 0
        %638 = vmatmul.mubr.bf16.gmra.mxu0 %v516
        %v639 = vpop.f32.mrf.mxu0
        %v640 = vadd.f32 0.0, %v639
        %v641 = vpop.f32.mrf.mxu0
        %v642 = vpop.f32.mrf.mxu0
        %v643 = vadd.f32 0.0, %v642
        %v644 = vpop.f32.mrf.mxu0
        %645 = vdwg.mxu0
        %v646 = vadd.f32 %v505, %v616
        %v647 = vadd.f32 %v506, %v619
        %v648 = vadd.f32 %v507, %v624
        %v649 = vadd.f32 %v508, %v627
        %v650 = vadd.f32 %v509, %v632
        %v651 = vadd.f32 %v510, %v635
        %v652 = vadd.f32 %v511, %v640
        %v653 = vadd.f32 %v512, %v643
        %654 = vst [vmem:[#allocation2] sm:$0xff] %v646
        %655 = vst [vmem:[#allocation2 + $0x8] sm:$0xff] %v647
        %656 = vst [vmem:[#allocation2 + $0x10] sm:$0xff] %v648
        %657 = vst [vmem:[#allocation2 + $0x18] sm:$0xff] %v649
        %658 = vst [vmem:[#allocation2 + $0x20] sm:$0xff] %v650
        %659 = vst [vmem:[#allocation2 + $0x28] sm:$0xff] %v651
        %660 = vst [vmem:[#allocation2 + $0x30] sm:$0xff] %v652
        %661 = vst [vmem:[#allocation2 + $0x38] sm:$0xff] %v653
        // Predicated region
        $region45: #{tpu_custom_call.1} parent=39 // pred_check
          %p662 = pneg %p292
        $region46: #{tpu_custom_call.1} parent=39 // pred_check_branch
          %664 = sbr.rel (%p662) target = $region48
        $region47: #{tpu_custom_call.1} parent=39 // pred_region
          %v665 = vld [vmem:[#allocation2] sm:$0xff]
          %v666 = vld [vmem:[#allocation2 + $0x8] sm:$0xff]
          %v667 = vld [vmem:[#allocation2 + $0x10] sm:$0xff]
          %v668 = vld [vmem:[#allocation2 + $0x18] sm:$0xff]
          %v669 = vld [vmem:[#allocation2 + $0x20] sm:$0xff]
          %v670 = vld [vmem:[#allocation2 + $0x28] sm:$0xff]
          %v671 = vld [vmem:[#allocation2 + $0x30] sm:$0xff]
          %v672 = vld [vmem:[#allocation2 + $0x38] sm:$0xff]
          %v673 = vld [vmem:[%s4] sm:$0x1]
          %v675 = vlaneseq
          %v676 = vshrl.u32 %v675, 7
          %v677 = vsub.s32 0, %v676
          %v678 = vrot.slane %v673, %v677
          %v680 = vadd.f32 %v665, %v678
          %v681 = vadd.f32 %v666, %v678
          %v682 = vadd.f32 %v667, %v678
          %v683 = vadd.f32 %v668, %v678
          %v684 = vadd.f32 %v669, %v678
          %v685 = vadd.f32 %v670, %v678
          %v686 = vadd.f32 %v671, %v678
          %v687 = vadd.f32 %v672, %v678
          %688 = vst [vmem:[%s270] sm:$0xff] %v680
          %689 = vst [vmem:[%s270 + $0x8] sm:$0xff] %v681
          %690 = vst [vmem:[%s270 + $0x10] sm:$0xff] %v682
          %691 = vst [vmem:[%s270 + $0x18] sm:$0xff] %v683
          %692 = vst [vmem:[%s270 + $0x20] sm:$0xff] %v684
          %693 = vst [vmem:[%s270 + $0x28] sm:$0xff] %v685
          %694 = vst [vmem:[%s270 + $0x30] sm:$0xff] %v686
          %695 = vst [vmem:[%s270 + $0x38] sm:$0xff] %v687
        $region48: #{tpu_custom_call.1} parent=39 // pred_fallthru
          _
        %s696 = sand.u32 %s164, 1
        %s697 = scalar_lea.sflag [#allocation4], %s696
        %s698 = sand.u32 %s164, 1
        %s699 = smul.addr %s698, 64
        %s700 = scalar_lea.vmem [#allocation3], %s699
        // Predicated region
        $region49: #{tpu_custom_call.1} parent=39 // pred_check
          %p701 = pneg %p174
        $region50: #{tpu_custom_call.1} parent=39 // pred_check_branch
          %703 = sbr.rel (%p701) target = $region52
        $region51: #{tpu_custom_call.1} parent=39 // pred_region
          %s704 = smul.u32 8, %s23
          %s706 = ssub.s32 1024, 1024
          %707 = vsyncadd %s697, %s706
          %s708 = smul.addr %s704, 128
          %s709 = scalar_lea.hbm %s5, %s708
          %s710 = sshll.u32 %s700, 4
          %s711 = int_to_ptr.vmem [resolvable:$true] %s710
          %716 = dma.vmem_to_hbm [thread:$0]  %s711, 1024, %s709, %s697, 128, 128, 8
        $region52: #{tpu_custom_call.1} parent=39 // pred_fallthru
          _
      $region40: #{tpu_custom_call.1} parent=5 // pred_fallthru
        _
      %p717 = scmp.le.s32.totalorder 2, %s14
      // Predicated region
      $region53: #{tpu_custom_call.1} parent=5 // pred_check
        %p718 = pneg %p717
      $region54: #{tpu_custom_call.1} parent=5 // pred_check_branch
        %720 = sbr.rel (%p718) target = $region56
      $region55: #{tpu_custom_call.1} parent=5 // pred_region
        %s721 = ssub.s32 %s14, 2
        // Predicated region
        $region57: #{tpu_custom_call.1} parent=55 // pred_check
          %p722 = pneg %p180
        $region58: #{tpu_custom_call.1} parent=55 // pred_check_branch
          %724 = sbr.rel (%p722) target = $region60
        $region59: #{tpu_custom_call.1} parent=55 // pred_region
          %s725 = sand.u32 %s165, 1
          %s726 = scalar_lea.sflag [#allocation4], %s725
          %s727 = sand.u32 %s165, 1
          %s728 = smul.addr %s727, 64
          %s729 = scalar_lea.vmem [#allocation3], %s728
          %730 = dma.done %s726, 1024
        $region60: #{tpu_custom_call.1} parent=55 // pred_fallthru
          _
      $region56: #{tpu_custom_call.1} parent=5 // pred_fallthru
        _
    $region6: #{tpu_custom_call.1} parent=1 // loop_footer
      %s18 = sadd.s32 1, %s14
    $region7: #{tpu_custom_call.1} parent=1 // loop_footer_branch
      %13 = sbr.rel target = $region3
    $region8: #{tpu_custom_call.1} parent=1 // loop_exit
      _
    %731 = vsyncpa [#allocation4], 1
    %s732 = scalar_lea.sflag [#allocation4], 1
    %733 = vsyncpa %s732, 1

</llo_original>
